<compile_context>
chip_gen: v6e
topology: v6e:2x2x1
jax: 0.10.0
libtpu: 0.0.40
codegen_flags: <defaults>
</compile_context>

<pallas_src>
import functools

import jax
import jax.numpy as jnp
from jax.experimental import pallas as pl
from jax.experimental.pallas import tpu as pltpu

LANE = 128


def _relu6(x):
    return jnp.clip(x, 0.0, 6.0)


def _ceil_to(x, m):
    return ((x + m - 1) // m) * m


def _cdiv(a, b):
    return (a + b - 1) // b


def _const_spec(arr):
    nd = arr.ndim
    return pl.BlockSpec(arr.shape, lambda n, i, _nd=nd: (0,) * _nd)


# ----------------------------------------------------------------------------
# stride == 1 kernel
# ----------------------------------------------------------------------------
def _kernel_s1(*refs, has_expand, use_shortcut, H, W, TH, nH):
    if has_expand:
        (x_ref, w1_ref, b1_ref, dw_ref, b2_ref, w3_ref, b3_ref,
         o_ref, h_ref) = refs
    else:
        (x_ref, dw_ref, b2_ref, w3_ref, b3_ref, o_ref, h_ref) = refs
        w1_ref = b1_ref = None

    i = pl.program_id(1)
    cin = x_ref.shape[-1]
    chid = h_ref.shape[-1]
    bf16 = jnp.bfloat16

    def expand(xs):                       # (R, W, cin) f32 -> (R, W, chid) bf16
        if not has_expand:
            return xs.astype(bf16)
        r = xs.shape[0]
        v = jnp.dot(xs.reshape(r * W, cin).astype(bf16), w1_ref[...],
                    preferred_element_type=jnp.float32)
        v = _relu6(v + b1_ref[0])
        return v.astype(bf16).reshape(r, W, chid)

    def expand_store(dst, src, nrows):
        v = expand(x_ref[0, pl.ds(src, nrows)])
        # Single column-padded store per step (zero halo columns come with it).
        h_ref[dst:dst + nrows, :, :] = jnp.pad(v, ((0, 0), (1, 1), (0, 0)))

    def zero_rows(start, nrows):
        h_ref[start:start + nrows, :, :] = jnp.zeros((nrows, W + 2, chid), bf16)

    # ---- 1x1 expand + ReLU6 into the bf16 halo scratch (rows r0-1..r0+TH).
    # Halo rows are recomputed inside the *same* merged matmul; zero rows are
    # written only on the tiles that actually touch the image border.
    if nH == 1:                                    # TH == H
        zero_rows(0, 1)
        expand_store(1, 0, H)
        zero_rows(H + 1, TH + 1 - H)
    else:
        r0_last = (nH - 1) * TH
        n_last = H - r0_last + 1                   # real rows in the last tile

        @pl.when(i == 0)
        def _():
            zero_rows(0, 1)
            expand_store(1, 0, TH + 1)

        @pl.when(i == nH - 1)
        def _():
            expand_store(0, r0_last - 1, n_last)
            zero_rows(n_last, TH + 2 - n_last)     # bottom padding / ragged H

        if nH > 2:
            @pl.when(jnp.logical_and(i > 0, i < nH - 1))
            def _():
                expand_store(0, i * TH - 1, TH + 2)

    # ---- 3x3 depthwise conv in bf16; taps read straight from VMEM. ----
    dw = dw_ref[...]                               # (3, 3, chid) bf16
    acc = None
    for di in range(3):
        for dj in range(3):
            tap = h_ref[di:di + TH, dj:dj + W, :]  # (TH, W, chid) bf16
            term = tap * dw[di, dj]
            acc = term if acc is None else acc + term
    d = _relu6(acc.astype(jnp.float32) + b2_ref[0])

    # ---- 1x1 project conv (MXU) + folded BN (linear) + shortcut. ----
    y = jnp.dot(d.reshape(TH * W, chid).astype(bf16), w3_ref[...],
                preferred_element_type=jnp.float32) + b3_ref[0]
    y = y.reshape(TH, W, -1)
    if use_shortcut:
        y = y + x_ref[0, pl.ds(i * TH, TH)]
    o_ref[0] = y.astype(o_ref.dtype)


# ----------------------------------------------------------------------------
# stride == 2 kernel (column-parity layout -> every tap is contiguous)
# ----------------------------------------------------------------------------
def _kernel_s2(*refs, has_expand, H, W, Ho, Wo, Wcp, TH, nH):
    if has_expand:
        (xe_ref, xo_ref, w1_ref, b1_ref, dw_ref, b2_ref, w3_ref, b3_ref,
         o_ref, he_ref, ho_ref) = refs
    else:
        (xe_ref, xo_ref, dw_ref, b2_ref, w3_ref, b3_ref,
         o_ref, he_ref, ho_ref) = refs
        w1_ref = b1_ref = None

    i = pl.program_id(1)
    cin = xe_ref.shape[-1]
    chid = he_ref.shape[-1]
    bf16 = jnp.bfloat16

    def expand(xs):                     # (R, Wcp, cin) f32 -> (R, Wcp, chid) bf16
        if not has_expand:
            return xs.astype(bf16)
        r = xs.shape[0]
        v = jnp.dot(xs.reshape(r * Wcp, cin).astype(bf16), w1_ref[...],
                    preferred_element_type=jnp.float32)
        v = _relu6(v + b1_ref[0])
        return v.astype(bf16).reshape(r, Wcp, chid)

    # Wrapper column layout: [pad | odd cols | (pad if W odd) | even cols | 0s],
    # wrapper row split: even input rows -> he (TH rows, BlockSpec-tiled),
    # odd input rows (incl. the 1-row top/bottom halo) -> ho (TH+1 rows).
    he_ref[...] = expand(xe_ref[0])
    ho_ref[...] = expand(xo_ref[0, pl.ds(i * TH, TH + 1)])

    if has_expand:
        # Conv zero-padding applies to the *expanded* activation: positions that
        # came from wrapper-inserted zero inputs (affine-expanded to
        # relu6(b1) != 0) are forced back to zero.
        he_ref[:, 0:1, :] = jnp.zeros((TH, 1, chid), bf16)
        ho_ref[:, 0:1, :] = jnp.zeros((TH + 1, 1, chid), bf16)
        if W % 2 == 1:
            he_ref[:, Wo:Wo + 1, :] = jnp.zeros((TH, 1, chid), bf16)
            ho_ref[:, Wo:Wo + 1, :] = jnp.zeros((TH + 1, 1, chid), bf16)

        @pl.when(i == 0)                # expanded image-top padding row
        def _():
            ho_ref[0:1, :, :] = jnp.zeros((1, Wcp, chid), bf16)

        if H % 2 == 1:                  # expanded image-bottom padding row
            r_pad = Ho - (nH - 1) * TH

            @pl.when(i == nH - 1)
            def _():
                ho_ref[r_pad:r_pad + 1, :, :] = jnp.zeros((1, Wcp, chid), bf16)

    # ---- 3x3 depthwise at stride 2: only the needed taps, all contiguous. ----
    col = {0: 0, 1: Wo + 1, 2: 1}       # dj -> start column in the parity layout
    dw = dw_ref[...]
    acc = None
    for di in range(3):
        for dj in range(3):
            c0 = col[dj]
            if di == 1:
                tap = he_ref[0:TH, c0:c0 + Wo, :]
            else:
                r0 = 0 if di == 0 else 1
                tap = ho_ref[r0:r0 + TH, c0:c0 + Wo, :]
            term = tap * dw[di, dj]
            acc = term if acc is None else acc + term
    d = _relu6(acc.astype(jnp.float32) + b2_ref[0])

    y = jnp.dot(d.reshape(TH * Wo, chid).astype(bf16), w3_ref[...],
                preferred_element_type=jnp.float32) + b3_ref[0]
    o_ref[0] = y.reshape(TH, Wo, -1).astype(o_ref.dtype)


# ----------------------------------------------------------------------------
# wrapper
# ----------------------------------------------------------------------------
def _pad_params(p, has_expand, Cin, hid, Cout, Cin_p, Chid_p, Cout_p):
    f32 = jnp.float32
    out = {}
    if has_expand:
        out["w1"] = jnp.pad(p["w1"], ((0, Cin_p - Cin),
                                      (0, Chid_p - hid))).astype(jnp.bfloat16)
        out["b1"] = jnp.pad(p["b1"], ((0, 0), (0, Chid_p - hid))).astype(f32)
    out["dw"] = jnp.pad(p["dw"], ((0, 0), (0, 0),
                                  (0, Chid_p - hid))).astype(jnp.bfloat16)
    out["b2"] = jnp.pad(p["b2"], ((0, 0), (0, Chid_p - hid))).astype(f32)
    out["w3"] = jnp.pad(p["w3"], ((0, Chid_p - hid),
                                  (0, Cout_p - Cout))).astype(jnp.bfloat16)
    out["b3"] = jnp.pad(p["b3"], ((0, 0), (0, Cout_p - Cout))).astype(f32)
    return out


def inverted_residual_pallas(x, p, *, stride, expand_ratio, row_tile=16):
    """x: (N, H, W, Cin) float32 NHWC.  Returns (N, Ho, Wo, Cout) float32."""
    assert stride in (1, 2)
    N, H, W, Cin = x.shape
    hid = p["dw"].shape[-1]
    Cout = p["w3"].shape[1]
    has_expand = (expand_ratio != 1)
    use_shortcut = (stride == 1) and (Cin == Cout)

    Cin_p = _ceil_to(Cin, LANE)
    Chid_p = _ceil_to(hid, LANE)
    Cout_p = _ceil_to(Cout, LANE)
    pp = _pad_params(p, has_expand, Cin, hid, Cout, Cin_p, Chid_p, Cout_p)
    wargs = ([pp["w1"], pp["b1"]] if has_expand else []) + \
            [pp["dw"], pp["b2"], pp["w3"], pp["b3"]]

    f32 = jnp.float32
    x = x.astype(f32)

    if stride == 1:
        Ho, Wo = H, W
        TH = min(row_tile, H)
        nH = _cdiv(H, TH)
        H_pad = nH * TH                             # ragged H -> padded last tile
        x_p = jnp.pad(x, ((0, 0), (0, H_pad - H), (0, 0), (0, Cin_p - Cin)))

        in_specs = [pl.BlockSpec((1, H_pad, W, Cin_p), lambda n, i: (n, 0, 0, 0))]
        in_specs += [_const_spec(a) for a in wargs]
        out_spec = pl.BlockSpec((1, TH, W, Cout_p), lambda n, i: (n, i, 0, 0))
        out_shape = jax.ShapeDtypeStruct((N, H_pad, W, Cout_p), f32)
        out_elems = N * H_pad * W * Cout_p
        scratch = [pltpu.VMEM((TH + 2, W + 2, Chid_p), jnp.bfloat16)]
        kernel = functools.partial(_kernel_s1, has_expand=has_expand,
                                   use_shortcut=use_shortcut,
                                   H=H, W=W, TH=TH, nH=nH)
        args = [x_p] + wargs
        in_block_bytes = (H_pad * W * Cin_p * 4
                          + sum(int(a.size) * a.dtype.itemsize for a in wargs))
        out_block_bytes = TH * W * Cout_p * 4
        scratch_bytes = (TH + 2) * (W + 2) * Chid_p * 2
    else:
        Ho = (H - 1) // 2 + 1
        Wo = (W - 1) // 2 + 1
        TH = min(row_tile, Ho)
        nH = _cdiv(Ho, TH)
        Ho_pad = nH * TH

        # Column-parity rearrangement (layout plumbing in XLA):
        #   [zero | odd cols | (zero if W odd) | even cols | zero pad to 8k]
        zc = jnp.zeros((N, H, 1, Cin), f32)
        pieces = [zc, x[:, :, 1::2, :]]
        if W % 2 == 1:
            pieces.append(zc)
        pieces.append(x[:, :, 0::2, :])
        xc = jnp.concatenate(pieces, axis=2)        # (N, H, 2*Wo+1, Cin)
        Wtot = 2 * Wo + 1
        Wcp = _ceil_to(Wtot, 8)
        xc = jnp.pad(xc, ((0, 0), (0, 0), (0, Wcp - Wtot), (0, Cin_p - Cin)))

        # Row-parity split: even rows are tiled directly by the BlockSpec; odd
        # rows carry a 1-row top halo (global row -1) and overlap tiles by one
        # row, so they stay whole and are sliced in-kernel.
        xe = jnp.pad(xc[:, 0::2], ((0, 0), (0, Ho_pad - Ho), (0, 0), (0, 0)))
        n_odd = H // 2
        xo = jnp.pad(xc[:, 1::2], ((0, 0), (1, Ho_pad - n_odd), (0, 0), (0, 0)))

        in_specs = [pl.BlockSpec((1, TH, Wcp, Cin_p), lambda n, i: (n, i, 0, 0)),
                    pl.BlockSpec((1, Ho_pad + 1, Wcp, Cin_p),
                                 lambda n, i: (n, 0, 0, 0))]
        in_specs += [_const_spec(a) for a in wargs]
        out_spec = pl.BlockSpec((1, TH, Wo, Cout_p), lambda n, i: (n, i, 0, 0))
        out_shape = jax.ShapeDtypeStruct((N, Ho_pad, Wo, Cout_p), f32)
        out_elems = N * Ho_pad * Wo * Cout_p
        scratch = [pltpu.VMEM((TH, Wcp, Chid_p), jnp.bfloat16),
                   pltpu.VMEM((TH + 1, Wcp, Chid_p), jnp.bfloat16)]
        kernel = functools.partial(_kernel_s2, has_expand=has_expand,
                                   H=H, W=W, Ho=Ho, Wo=Wo, Wcp=Wcp, TH=TH, nH=nH)
        args = [xe, xo] + wargs
        in_block_bytes = ((TH + Ho_pad + 1) * Wcp * Cin_p * 4
                          + sum(int(a.size) * a.dtype.itemsize for a in wargs))
        out_block_bytes = TH * Wo * Cout_p * 4
        scratch_bytes = (2 * TH + 1) * Wcp * Chid_p * 2

    flops = 2 * N * Ho * Wo * Chid_p * (9 + Cout_p)
    if has_expand:
        flops += 2 * N * H * W * Cin_p * Chid_p
    bytes_accessed = (sum(int(a.size) * a.dtype.itemsize for a in args)
                      + out_elems * 4)

    # VMEM: double-buffered in/out blocks + scratch, 2x headroom for in-kernel
    # temporaries, capped below the 64 MiB physical VMEM of a v7x TensorCore.
    vmem_need = 2 * (in_block_bytes + out_block_bytes) + scratch_bytes
    vmem_limit = int(min(max(2 * vmem_need, 32 * 1024 * 1024),
                         48 * 1024 * 1024))
    vmem_limit = max(vmem_limit, int(1.25 * vmem_need))

    out = pl.pallas_call(
        kernel,
        out_shape=out_shape,
        grid_spec=pltpu.PrefetchScalarGridSpec(
            num_scalar_prefetch=0,
            grid=(N, nH),
            in_specs=in_specs,
            out_specs=out_spec,
            scratch_shapes=scratch),
        compiler_params=pltpu.CompilerParams(
            dimension_semantics=("parallel", "parallel"),
            vmem_limit_bytes=vmem_limit),
        cost_estimate=pl.CostEstimate(flops=int(flops), transcendentals=0,
                                      bytes_accessed=int(bytes_accessed)),
    )(*args)
    return out[:, :Ho, :, :Cout]


# ----------------------------------------------------------------------------
# deterministic params (BatchNorm folded) and pure-JAX reference
# ----------------------------------------------------------------------------
def make_params(key, cin, cout, expand_ratio, eps=1e-5):
    hid = cin * expand_ratio
    ks = jax.random.split(key, 6)

    def bn_fold(k, c):
        kg, kb, km, kv = jax.random.split(k, 4)
        gamma = 1.0 + 0.1 * jax.random.normal(kg, (c,), jnp.float32)
        beta = 0.1 * jax.random.normal(kb, (c,), jnp.float32)
        mean = 0.1 * jax.random.normal(km, (c,), jnp.float32)
        var = jax.random.uniform(kv, (c,), jnp.float32, 0.5, 1.5)
        s = gamma / jnp.sqrt(var + eps)
        b = beta - mean * s
        return s, b

    params = {}
    if expand_ratio != 1:
        w1 = 0.3 * jax.random.normal(ks[0], (cin, hid), jnp.float32)
        s1, b1 = bn_fold(ks[1], hid)
        params["w1"] = w1 * s1[None, :]
        params["b1"] = b1.reshape(1, -1)
    dw = 0.3 * jax.random.normal(ks[2], (3, 3, hid), jnp.float32)
    s2, b2 = bn_fold(ks[3], hid)
    params["dw"] = dw * s2[None, None, :]
    params["b2"] = b2.reshape(1, -1)
    w3 = 0.3 * jax.random.normal(ks[4], (hid, cout), jnp.float32)
    s3, b3 = bn_fold(ks[5], cout)
    params["w3"] = w3 * s3[None, :]
    params["b3"] = b3.reshape(1, -1)
    return params


def reference(x, p, *, stride, expand_ratio):
    """Pure-JAX NHWC reference matching the kernel numerics: bf16-operand /
    f32-accumulate 1x1 convs, bf16 3x3 depthwise taps accumulated in the same
    order as the kernel."""
    N, H, W, Cin = x.shape
    Cout = p["w3"].shape[1]
    use_shortcut = (stride == 1) and (Cin == Cout)
    bf16 = jnp.bfloat16
    if expand_ratio != 1:
        h = _relu6(jnp.einsum("nhwc,cd->nhwd", x.astype(bf16),
                              p["w1"].astype(bf16),
                              preferred_element_type=jnp.float32) + p["b1"])
    else:
        h = x
    hid = h.shape[-1]
    Ho = (H - 1) // stride + 1
    Wo = (W - 1) // stride + 1
    hp = jnp.pad(h.astype(bf16), ((0, 0), (1, 1), (1, 1), (0, 0)))
    dw16 = p["dw"].astype(bf16)
    acc = None
    for di in range(3):
        for dj in range(3):
            tap = jax.lax.slice(
                hp, (0, di, dj, 0),
                (N, di + (Ho - 1) * stride + 1, dj + (Wo - 1) * stride + 1, hid),
                (1, stride, stride, 1))
            term = tap * dw16[di, dj]
            acc = term if acc is None else acc + term
    d = _relu6(acc.astype(jnp.float32) + p["b2"])
    y = jnp.einsum("nhwc,cd->nhwd", d.astype(bf16), p["w3"].astype(bf16),
                   preferred_element_type=jnp.float32) + p["b3"]
    if use_shortcut:
        y = y + x
    return y


if __name__ == "__main__":
    key = jax.random.PRNGKey(0)
    configs = [
        # (N, H, W, cin, cout, stride, expand_ratio, row_tile)
        (2, 16, 16, 4, 4, 1, 2, 8),   # expand + shortcut, two row tiles
        (2, 24, 16, 8, 8, 1, 1, 8),   # no expand conv, shortcut, interior tile
        (2, 15, 15, 4, 8, 2, 6, 4),   # stride 2, odd spatial size, no shortcut
    ]
    for (N, H, W, cin, cout, stride, er, rt) in configs:
        key, kx, kp = jax.random.split(key, 3)
        x = jax.random.normal(kx, (N, H, W, cin), jnp.float32)   # NHWC input
        params = make_params(kp, cin, cout, er)

        y = inverted_residual_pallas(x, params, stride=stride,
                                     expand_ratio=er, row_tile=rt)
        y = jax.block_until_ready(y)

        y_ref = reference(x, params, stride=stride, expand_ratio=er)
        assert y.shape == y_ref.shape, (y.shape, y_ref.shape)
        err = float(jnp.max(jnp.abs(y - y_ref)))
        assert jnp.allclose(y, y_ref, atol=2e-2, rtol=2e-2), \
            f"cfg={(N, H, W, cin, cout, stride, er)} max abs err {err}"
    print("KERNEL_OK")
</pallas_src>

<mosaic_0001>
module attributes {stable_mosaic.version = 11 : i64} {
  func.func @_kernel_s1(%arg0: i32, %arg1: i32, %arg2: memref<1x16x16x128xf32, #tpu.memory_space<vmem>>, %arg3: memref<128x128xbf16, #tpu.memory_space<vmem>>, %arg4: memref<1x128xf32, #tpu.memory_space<vmem>>, %arg5: memref<3x3x128xbf16, #tpu.memory_space<vmem>>, %arg6: memref<1x128xf32, #tpu.memory_space<vmem>>, %arg7: memref<128x128xbf16, #tpu.memory_space<vmem>>, %arg8: memref<1x128xf32, #tpu.memory_space<vmem>>, %arg9: memref<1x8x16x128xf32, #tpu.memory_space<vmem>>, %arg10: memref<10x18x128xbf16, #tpu.memory_space<vmem>>) attributes {dimension_semantics = [#tpu.dimension_semantics<parallel>, #tpu.dimension_semantics<parallel>], iteration_bounds = array<i64: 2, 2>, scalar_prefetch = 0 : i64, scratch_operands = 1 : i64, tpu.core_type = #tpu.core_type<tc>, window_params = [{transform_indices = @transform_0, window_bounds = array<i64: 1, 16, 16, 128>}, {pipeline_mode = #tpu.pipeline_mode<synchronous>, transform_indices = @transform_1, window_bounds = array<i64: 128, 128>}, {pipeline_mode = #tpu.pipeline_mode<synchronous>, transform_indices = @transform_2, window_bounds = array<i64: 1, 128>}, {pipeline_mode = #tpu.pipeline_mode<synchronous>, transform_indices = @transform_3, window_bounds = array<i64: 3, 3, 128>}, {pipeline_mode = #tpu.pipeline_mode<synchronous>, transform_indices = @transform_4, window_bounds = array<i64: 1, 128>}, {pipeline_mode = #tpu.pipeline_mode<synchronous>, transform_indices = @transform_5, window_bounds = array<i64: 128, 128>}, {pipeline_mode = #tpu.pipeline_mode<synchronous>, transform_indices = @transform_6, window_bounds = array<i64: 1, 128>}, {transform_indices = @transform_7, window_bounds = array<i64: 1, 8, 16, 128>}]} {
    %c0_i32 = arith.constant 0 : i32
    %0 = arith.cmpi eq, %arg1, %c0_i32 : i32
    %1 = arith.extui %0 : i1 to i32
    %c0_i32_0 = arith.constant 0 : i32
    %2 = arith.cmpi ne, %1, %c0_i32_0 : i32
    scf.if %2 {
      %cst_44 = arith.constant 0.000000e+00 : bf16
      %97 = vector.broadcast %cst_44 : bf16 to vector<1x18x128xbf16>
      %c0_45 = arith.constant 0 : index
      %c0_46 = arith.constant 0 : index
      %c0_47 = arith.constant 0 : index
      %98 = vector.load %arg10[%c0_45, %c0_46, %c0_47] : memref<10x18x128xbf16, #tpu.memory_space<vmem>>, vector<1x18x128xbf16>
      tpu.vector_store %arg10[%c0_45, %c0_46, %c0_47], %97 {strides = array<i32>} : memref<10x18x128xbf16, #tpu.memory_space<vmem>>, vector<1x18x128xbf16>,
      %c0_48 = arith.constant 0 : index
      %c0_49 = arith.constant 0 : index
      %c0_50 = arith.constant 0 : index
      %c0_51 = arith.constant 0 : index
      %99 = vector.load %arg2[%c0_48, %c0_49, %c0_50, %c0_51] : memref<1x16x16x128xf32, #tpu.memory_space<vmem>>, vector<1x9x16x128xf32>
      %100 = vector.shape_cast %99 : vector<1x9x16x128xf32> to vector<9x16x128xf32>
      %101 = vector.shape_cast %100 : vector<9x16x128xf32> to vector<144x128xf32>
      %102 = arith.truncf %101 : vector<144x128xf32> to vector<144x128xbf16>
      %c0_52 = arith.constant 0 : index
      %c0_53 = arith.constant 0 : index
      %103 = vector.load %arg3[%c0_52, %c0_53] : memref<128x128xbf16, #tpu.memory_space<vmem>>, vector<128x128xbf16>
      %cst_54 = arith.constant dense<0.000000e+00> : vector<144x128xf32>
      %104 = tpu.matmul %102, %103, %cst_54 {dimension_numbers = #tpu.dot_dimension_numbers<[1], [0], [0], [1], [0, 0, 1, 1], [], []>} : vector<144x128xbf16>, vector<128x128xbf16>, vector<144x128xf32> -> vector<144x128xf32>
      %c0_55 = arith.constant 0 : index
      %c0_56 = arith.constant 0 : index
      %105 = vector.load %arg4[%c0_55, %c0_56] : memref<1x128xf32, #tpu.memory_space<vmem>>, vector<1x128xf32>
      %106 = vector.shape_cast %105 : vector<1x128xf32> to vector<128xf32>
      %107 = vector.shape_cast %106 : vector<128xf32> to vector<1x128xf32>
      %108 = vector.broadcast %107 : vector<1x128xf32> to vector<144x128xf32>
      %109 = arith.addf %104, %108 : vector<144x128xf32>
      %cst_57 = arith.constant 0.000000e+00 : f32
      %cst_58 = arith.constant 6.000000e+00 : f32
      %110 = vector.broadcast %cst_57 : f32 to vector<144x128xf32>
      %111 = arith.maximumf %110, %109 : vector<144x128xf32>
      %112 = vector.broadcast %cst_58 : f32 to vector<144x128xf32>
      %113 = arith.minimumf %112, %111 : vector<144x128xf32>
      %114 = arith.truncf %113 : vector<144x128xf32> to vector<144x128xbf16>
      %115 = vector.shape_cast %114 : vector<144x128xbf16> to vector<9x16x128xbf16>
      %c0_i32_59 = arith.constant 0 : i32
      %116 = arith.sitofp %c0_i32_59 : i32 to bf16
      %117 = vector.broadcast %116 : bf16 to vector<9x1x128xbf16>
      %118 = tpu.concatenate %117, %115 in 1 : vector<9x1x128xbf16>, vector<9x16x128xbf16> -> vector<9x17x128xbf16>
      %119 = vector.broadcast %116 : bf16 to vector<9x1x128xbf16>
      %120 = tpu.concatenate %118, %119 in 1 : vector<9x17x128xbf16>, vector<9x1x128xbf16> -> vector<9x18x128xbf16>
      %c1_60 = arith.constant 1 : index
      %c0_61 = arith.constant 0 : index
      %c0_62 = arith.constant 0 : index
      %121 = vector.load %arg10[%c1_60, %c0_61, %c0_62] : memref<10x18x128xbf16, #tpu.memory_space<vmem>>, vector<9x18x128xbf16>
      tpu.vector_store %arg10[%c1_60, %c0_61, %c0_62], %120 {strides = array<i32>} : memref<10x18x128xbf16, #tpu.memory_space<vmem>>, vector<9x18x128xbf16>,
    } else {
    }
    %c1_i32 = arith.constant 1 : i32
    %3 = arith.cmpi eq, %arg1, %c1_i32 : i32
    %4 = arith.extui %3 : i1 to i32
    %c0_i32_1 = arith.constant 0 : i32
    %5 = arith.cmpi ne, %4, %c0_i32_1 : i32
    scf.if %5 {
      %c0_44 = arith.constant 0 : index
      %c7 = arith.constant 7 : index
      %c0_45 = arith.constant 0 : index
      %c0_46 = arith.constant 0 : index
      %97 = vector.load %arg2[%c0_44, %c7, %c0_45, %c0_46] : memref<1x16x16x128xf32, #tpu.memory_space<vmem>>, vector<1x9x16x128xf32>
      %98 = vector.shape_cast %97 : vector<1x9x16x128xf32> to vector<9x16x128xf32>
      %99 = vector.shape_cast %98 : vector<9x16x128xf32> to vector<144x128xf32>
      %100 = arith.truncf %99 : vector<144x128xf32> to vector<144x128xbf16>
      %c0_47 = arith.constant 0 : index
      %c0_48 = arith.constant 0 : index
      %101 = vector.load %arg3[%c0_47, %c0_48] : memref<128x128xbf16, #tpu.memory_space<vmem>>, vector<128x128xbf16>
      %cst_49 = arith.constant dense<0.000000e+00> : vector<144x128xf32>
      %102 = tpu.matmul %100, %101, %cst_49 {dimension_numbers = #tpu.dot_dimension_numbers<[1], [0], [0], [1], [0, 0, 1, 1], [], []>} : vector<144x128xbf16>, vector<128x128xbf16>, vector<144x128xf32> -> vector<144x128xf32>
      %c0_50 = arith.constant 0 : index
      %c0_51 = arith.constant 0 : index
      %103 = vector.load %arg4[%c0_50, %c0_51] : memref<1x128xf32, #tpu.memory_space<vmem>>, vector<1x128xf32>
      %104 = vector.shape_cast %103 : vector<1x128xf32> to vector<128xf32>
      %105 = vector.shape_cast %104 : vector<128xf32> to vector<1x128xf32>
      %106 = vector.broadcast %105 : vector<1x128xf32> to vector<144x128xf32>
      %107 = arith.addf %102, %106 : vector<144x128xf32>
      %cst_52 = arith.constant 0.000000e+00 : f32
      %cst_53 = arith.constant 6.000000e+00 : f32
      %108 = vector.broadcast %cst_52 : f32 to vector<144x128xf32>
      %109 = arith.maximumf %108, %107 : vector<144x128xf32>
      %110 = vector.broadcast %cst_53 : f32 to vector<144x128xf32>
      %111 = arith.minimumf %110, %109 : vector<144x128xf32>
      %112 = arith.truncf %111 : vector<144x128xf32> to vector<144x128xbf16>
      %113 = vector.shape_cast %112 : vector<144x128xbf16> to vector<9x16x128xbf16>
      %c0_i32_54 = arith.constant 0 : i32
      %114 = arith.sitofp %c0_i32_54 : i32 to bf16
      %115 = vector.broadcast %114 : bf16 to vector<9x1x128xbf16>
      %116 = tpu.concatenate %115, %113 in 1 : vector<9x1x128xbf16>, vector<9x16x128xbf16> -> vector<9x17x128xbf16>
      %117 = vector.broadcast %114 : bf16 to vector<9x1x128xbf16>
      %118 = tpu.concatenate %116, %117 in 1 : vector<9x17x128xbf16>, vector<9x1x128xbf16> -> vector<9x18x128xbf16>
      %c0_55 = arith.constant 0 : index
      %c0_56 = arith.constant 0 : index
      %c0_57 = arith.constant 0 : index
      %119 = vector.load %arg10[%c0_55, %c0_56, %c0_57] : memref<10x18x128xbf16, #tpu.memory_space<vmem>>, vector<9x18x128xbf16>
      tpu.vector_store %arg10[%c0_55, %c0_56, %c0_57], %118 {strides = array<i32>} : memref<10x18x128xbf16, #tpu.memory_space<vmem>>, vector<9x18x128xbf16>,
      %cst_58 = arith.constant 0.000000e+00 : bf16
      %120 = vector.broadcast %cst_58 : bf16 to vector<1x18x128xbf16>
      %c9 = arith.constant 9 : index
      %c0_59 = arith.constant 0 : index
      %c0_60 = arith.constant 0 : index
      %121 = vector.load %arg10[%c9, %c0_59, %c0_60] : memref<10x18x128xbf16, #tpu.memory_space<vmem>>, vector<1x18x128xbf16>
      tpu.vector_store %arg10[%c9, %c0_59, %c0_60], %120 {strides = array<i32>} : memref<10x18x128xbf16, #tpu.memory_space<vmem>>, vector<1x18x128xbf16>,
    } else {
    }
    %c0 = arith.constant 0 : index
    %c0_2 = arith.constant 0 : index
    %c0_3 = arith.constant 0 : index
    %6 = vector.load %arg5[%c0, %c0_2, %c0_3] : memref<3x3x128xbf16, #tpu.memory_space<vmem>>, vector<3x3x128xbf16>
    %c0_4 = arith.constant 0 : index
    %c0_5 = arith.constant 0 : index
    %c0_6 = arith.constant 0 : index
    %7 = vector.load %arg10[%c0_4, %c0_5, %c0_6] : memref<10x18x128xbf16, #tpu.memory_space<vmem>>, vector<8x16x128xbf16>
    %8 = vector.extract_strided_slice %6 {offsets = [0, 0, 0], sizes = [1, 1, 128], strides = [1, 1, 1]} : vector<3x3x128xbf16> to vector<1x1x128xbf16>
    %9 = vector.shape_cast %8 : vector<1x1x128xbf16> to vector<128xbf16>
    %10 = vector.shape_cast %9 : vector<128xbf16> to vector<1x1x128xbf16>
    %11 = vector.broadcast %10 : vector<1x1x128xbf16> to vector<8x16x128xbf16>
    %12 = arith.mulf %7, %11 : vector<8x16x128xbf16>
    %c0_7 = arith.constant 0 : index
    %c1 = arith.constant 1 : index
    %c0_8 = arith.constant 0 : index
    %13 = vector.load %arg10[%c0_7, %c1, %c0_8] : memref<10x18x128xbf16, #tpu.memory_space<vmem>>, vector<8x16x128xbf16>
    %14 = vector.extract_strided_slice %6 {offsets = [0, 1, 0], sizes = [1, 1, 128], strides = [1, 1, 1]} : vector<3x3x128xbf16> to vector<1x1x128xbf16>
    %15 = vector.shape_cast %14 : vector<1x1x128xbf16> to vector<128xbf16>
    %16 = vector.shape_cast %15 : vector<128xbf16> to vector<1x1x128xbf16>
    %17 = vector.broadcast %16 : vector<1x1x128xbf16> to vector<8x16x128xbf16>
    %18 = arith.mulf %13, %17 : vector<8x16x128xbf16>
    %19 = arith.addf %12, %18 : vector<8x16x128xbf16>
    %c0_9 = arith.constant 0 : index
    %c2 = arith.constant 2 : index
    %c0_10 = arith.constant 0 : index
    %20 = vector.load %arg10[%c0_9, %c2, %c0_10] : memref<10x18x128xbf16, #tpu.memory_space<vmem>>, vector<8x16x128xbf16>
    %21 = vector.extract_strided_slice %6 {offsets = [0, 2, 0], sizes = [1, 1, 128], strides = [1, 1, 1]} : vector<3x3x128xbf16> to vector<1x1x128xbf16>
    %22 = vector.shape_cast %21 : vector<1x1x128xbf16> to vector<128xbf16>
    %23 = vector.shape_cast %22 : vector<128xbf16> to vector<1x1x128xbf16>
    %24 = vector.broadcast %23 : vector<1x1x128xbf16> to vector<8x16x128xbf16>
    %25 = arith.mulf %20, %24 : vector<8x16x128xbf16>
    %26 = arith.addf %19, %25 : vector<8x16x128xbf16>
    %c1_11 = arith.constant 1 : index
    %c0_12 = arith.constant 0 : index
    %c0_13 = arith.constant 0 : index
    %27 = vector.load %arg10[%c1_11, %c0_12, %c0_13] : memref<10x18x128xbf16, #tpu.memory_space<vmem>>, vector<8x16x128xbf16>
    %28 = vector.extract_strided_slice %6 {offsets = [1, 0, 0], sizes = [1, 1, 128], strides = [1, 1, 1]} : vector<3x3x128xbf16> to vector<1x1x128xbf16>
    %29 = vector.shape_cast %28 : vector<1x1x128xbf16> to vector<128xbf16>
    %30 = vector.shape_cast %29 : vector<128xbf16> to vector<1x1x128xbf16>
    %31 = vector.broadcast %30 : vector<1x1x128xbf16> to vector<8x16x128xbf16>
    %32 = arith.mulf %27, %31 : vector<8x16x128xbf16>
    %33 = arith.addf %26, %32 : vector<8x16x128xbf16>
    %c1_14 = arith.constant 1 : index
    %c1_15 = arith.constant 1 : index
    %c0_16 = arith.constant 0 : index
    %34 = vector.load %arg10[%c1_14, %c1_15, %c0_16] : memref<10x18x128xbf16, #tpu.memory_space<vmem>>, vector<8x16x128xbf16>
    %35 = vector.extract_strided_slice %6 {offsets = [1, 1, 0], sizes = [1, 1, 128], strides = [1, 1, 1]} : vector<3x3x128xbf16> to vector<1x1x128xbf16>
    %36 = vector.shape_cast %35 : vector<1x1x128xbf16> to vector<128xbf16>
    %37 = vector.shape_cast %36 : vector<128xbf16> to vector<1x1x128xbf16>
    %38 = vector.broadcast %37 : vector<1x1x128xbf16> to vector<8x16x128xbf16>
    %39 = arith.mulf %34, %38 : vector<8x16x128xbf16>
    %40 = arith.addf %33, %39 : vector<8x16x128xbf16>
    %c1_17 = arith.constant 1 : index
    %c2_18 = arith.constant 2 : index
    %c0_19 = arith.constant 0 : index
    %41 = vector.load %arg10[%c1_17, %c2_18, %c0_19] : memref<10x18x128xbf16, #tpu.memory_space<vmem>>, vector<8x16x128xbf16>
    %42 = vector.extract_strided_slice %6 {offsets = [1, 2, 0], sizes = [1, 1, 128], strides = [1, 1, 1]} : vector<3x3x128xbf16> to vector<1x1x128xbf16>
    %43 = vector.shape_cast %42 : vector<1x1x128xbf16> to vector<128xbf16>
    %44 = vector.shape_cast %43 : vector<128xbf16> to vector<1x1x128xbf16>
    %45 = vector.broadcast %44 : vector<1x1x128xbf16> to vector<8x16x128xbf16>
    %46 = arith.mulf %41, %45 : vector<8x16x128xbf16>
    %47 = arith.addf %40, %46 : vector<8x16x128xbf16>
    %c2_20 = arith.constant 2 : index
    %c0_21 = arith.constant 0 : index
    %c0_22 = arith.constant 0 : index
    %48 = vector.load %arg10[%c2_20, %c0_21, %c0_22] : memref<10x18x128xbf16, #tpu.memory_space<vmem>>, vector<8x16x128xbf16>
    %49 = vector.extract_strided_slice %6 {offsets = [2, 0, 0], sizes = [1, 1, 128], strides = [1, 1, 1]} : vector<3x3x128xbf16> to vector<1x1x128xbf16>
    %50 = vector.shape_cast %49 : vector<1x1x128xbf16> to vector<128xbf16>
    %51 = vector.shape_cast %50 : vector<128xbf16> to vector<1x1x128xbf16>
    %52 = vector.broadcast %51 : vector<1x1x128xbf16> to vector<8x16x128xbf16>
    %53 = arith.mulf %48, %52 : vector<8x16x128xbf16>
    %54 = arith.addf %47, %53 : vector<8x16x128xbf16>
    %c2_23 = arith.constant 2 : index
    %c1_24 = arith.constant 1 : index
    %c0_25 = arith.constant 0 : index
    %55 = vector.load %arg10[%c2_23, %c1_24, %c0_25] : memref<10x18x128xbf16, #tpu.memory_space<vmem>>, vector<8x16x128xbf16>
    %56 = vector.extract_strided_slice %6 {offsets = [2, 1, 0], sizes = [1, 1, 128], strides = [1, 1, 1]} : vector<3x3x128xbf16> to vector<1x1x128xbf16>
    %57 = vector.shape_cast %56 : vector<1x1x128xbf16> to vector<128xbf16>
    %58 = vector.shape_cast %57 : vector<128xbf16> to vector<1x1x128xbf16>
    %59 = vector.broadcast %58 : vector<1x1x128xbf16> to vector<8x16x128xbf16>
    %60 = arith.mulf %55, %59 : vector<8x16x128xbf16>
    %61 = arith.addf %54, %60 : vector<8x16x128xbf16>
    %c2_26 = arith.constant 2 : index
    %c2_27 = arith.constant 2 : index
    %c0_28 = arith.constant 0 : index
    %62 = vector.load %arg10[%c2_26, %c2_27, %c0_28] : memref<10x18x128xbf16, #tpu.memory_space<vmem>>, vector<8x16x128xbf16>
    %63 = vector.extract_strided_slice %6 {offsets = [2, 2, 0], sizes = [1, 1, 128], strides = [1, 1, 1]} : vector<3x3x128xbf16> to vector<1x1x128xbf16>
    %64 = vector.shape_cast %63 : vector<1x1x128xbf16> to vector<128xbf16>
    %65 = vector.shape_cast %64 : vector<128xbf16> to vector<1x1x128xbf16>
    %66 = vector.broadcast %65 : vector<1x1x128xbf16> to vector<8x16x128xbf16>
    %67 = arith.mulf %62, %66 : vector<8x16x128xbf16>
    %68 = arith.addf %61, %67 : vector<8x16x128xbf16>
    %69 = arith.extf %68 : vector<8x16x128xbf16> to vector<8x16x128xf32>
    %c0_29 = arith.constant 0 : index
    %c0_30 = arith.constant 0 : index
    %70 = vector.load %arg6[%c0_29, %c0_30] : memref<1x128xf32, #tpu.memory_space<vmem>>, vector<1x128xf32>
    %71 = vector.shape_cast %70 : vector<1x128xf32> to vector<128xf32>
    %72 = vector.shape_cast %71 : vector<128xf32> to vector<1x1x128xf32>
    %73 = vector.broadcast %72 : vector<1x1x128xf32> to vector<8x16x128xf32>
    %74 = arith.addf %69, %73 : vector<8x16x128xf32>
    %cst = arith.constant 0.000000e+00 : f32
    %cst_31 = arith.constant 6.000000e+00 : f32
    %75 = vector.broadcast %cst : f32 to vector<8x16x128xf32>
    %76 = arith.maximumf %75, %74 : vector<8x16x128xf32>
    %77 = vector.broadcast %cst_31 : f32 to vector<8x16x128xf32>
    %78 = arith.minimumf %77, %76 : vector<8x16x128xf32>
    %79 = vector.shape_cast %78 : vector<8x16x128xf32> to vector<128x128xf32>
    %80 = arith.truncf %79 : vector<128x128xf32> to vector<128x128xbf16>
    %c0_32 = arith.constant 0 : index
    %c0_33 = arith.constant 0 : index
    %81 = vector.load %arg7[%c0_32, %c0_33] : memref<128x128xbf16, #tpu.memory_space<vmem>>, vector<128x128xbf16>
    %cst_34 = arith.constant dense<0.000000e+00> : vector<128x128xf32>
    %82 = tpu.matmul %80, %81, %cst_34 {dimension_numbers = #tpu.dot_dimension_numbers<[1], [0], [0], [1], [0, 0, 1, 1], [], []>} : vector<128x128xbf16>, vector<128x128xbf16>, vector<128x128xf32> -> vector<128x128xf32>
    %c0_35 = arith.constant 0 : index
    %c0_36 = arith.constant 0 : index
    %83 = vector.load %arg8[%c0_35, %c0_36] : memref<1x128xf32, #tpu.memory_space<vmem>>, vector<1x128xf32>
    %84 = vector.shape_cast %83 : vector<1x128xf32> to vector<128xf32>
    %85 = vector.shape_cast %84 : vector<128xf32> to vector<1x128xf32>
    %86 = vector.broadcast %85 : vector<1x128xf32> to vector<128x128xf32>
    %87 = arith.addf %82, %86 : vector<128x128xf32>
    %88 = vector.shape_cast %87 : vector<128x128xf32> to vector<8x16x128xf32>
    %c8_i32 = arith.constant 8 : i32
    %89 = arith.muli %arg1, %c8_i32 : i32
    %c0_37 = arith.constant 0 : index
    %90 = arith.index_cast %89 : i32 to index
    %c0_38 = arith.constant 0 : index
    %c0_39 = arith.constant 0 : index
    %91 = vector.load %arg2[%c0_37, %90, %c0_38, %c0_39] : memref<1x16x16x128xf32, #tpu.memory_space<vmem>>, vector<1x8x16x128xf32>
    %92 = vector.shape_cast %91 : vector<1x8x16x128xf32> to vector<8x16x128xf32>
    %93 = arith.addf %88, %92 : vector<8x16x128xf32>
    %c0_40 = arith.constant 0 : index
    %c0_41 = arith.constant 0 : index
    %c0_42 = arith.constant 0 : index
    %c0_43 = arith.constant 0 : index
    %94 = vector.load %arg9[%c0_40, %c0_41, %c0_42, %c0_43] : memref<1x8x16x128xf32, #tpu.memory_space<vmem>>, vector<1x8x16x128xf32>
    %95 = vector.shape_cast %94 : vector<1x8x16x128xf32> to vector<8x16x128xf32>
    %96 = vector.shape_cast %93 : vector<8x16x128xf32> to vector<1x8x16x128xf32>
    tpu.vector_store %arg9[%c0_40, %c0_41, %c0_42, %c0_43], %96 {strides = array<i32>} : memref<1x8x16x128xf32, #tpu.memory_space<vmem>>, vector<1x8x16x128xf32>,
    return
  }
  func.func @transform_0(%arg0: i32, %arg1: i32) -> (i32, i32, i32, i32) {
    %c0_i32 = arith.constant 0 : i32
    %c0_i32_0 = arith.constant 0 : i32
    %c0_i32_1 = arith.constant 0 : i32
    %c0_i32_2 = arith.constant 0 : i32
    return %arg0, %c0_i32, %c0_i32_0, %c0_i32_1 : i32, i32, i32, i32
  }
  func.func @transform_1(%arg0: i32, %arg1: i32) -> (i32, i32) {
    %c0_i32 = arith.constant 0 : i32
    %c0_i32_0 = arith.constant 0 : i32
    %c0_i32_1 = arith.constant 0 : i32
    return %c0_i32, %c0_i32_0 : i32, i32
  }
  func.func @transform_2(%arg0: i32, %arg1: i32) -> (i32, i32) {
    %c0_i32 = arith.constant 0 : i32
    %c0_i32_0 = arith.constant 0 : i32
    %c0_i32_1 = arith.constant 0 : i32
    return %c0_i32, %c0_i32_0 : i32, i32
  }
  func.func @transform_3(%arg0: i32, %arg1: i32) -> (i32, i32, i32) {
    %c0_i32 = arith.constant 0 : i32
    %c0_i32_0 = arith.constant 0 : i32
    %c0_i32_1 = arith.constant 0 : i32
    %c0_i32_2 = arith.constant 0 : i32
    return %c0_i32, %c0_i32_0, %c0_i32_1 : i32, i32, i32
  }
  func.func @transform_4(%arg0: i32, %arg1: i32) -> (i32, i32) {
    %c0_i32 = arith.constant 0 : i32
    %c0_i32_0 = arith.constant 0 : i32
    %c0_i32_1 = arith.constant 0 : i32
    return %c0_i32, %c0_i32_0 : i32, i32
  }
  func.func @transform_5(%arg0: i32, %arg1: i32) -> (i32, i32) {
    %c0_i32 = arith.constant 0 : i32
    %c0_i32_0 = arith.constant 0 : i32
    %c0_i32_1 = arith.constant 0 : i32
    return %c0_i32, %c0_i32_0 : i32, i32
  }
  func.func @transform_6(%arg0: i32, %arg1: i32) -> (i32, i32) {
    %c0_i32 = arith.constant 0 : i32
    %c0_i32_0 = arith.constant 0 : i32
    %c0_i32_1 = arith.constant 0 : i32
    return %c0_i32, %c0_i32_0 : i32, i32
  }
  func.func @transform_7(%arg0: i32, %arg1: i32) -> (i32, i32, i32, i32) {
    %c0_i32 = arith.constant 0 : i32
    %c0_i32_0 = arith.constant 0 : i32
    %c0_i32_1 = arith.constant 0 : i32
    return %arg0, %arg1, %c0_i32, %c0_i32_0 : i32, i32, i32, i32
  }
}

</mosaic_0001>

<llo_original>
// kernel: tpu_custom_call.1
$region0: #{tpu_custom_call.1}
  #allocation0 [shape = 'u32[]', space=smem, size = 0x4, offset = 0x4, fixed_abs, tag = 'smem constant byte address 0x4 - core index']
  #allocation1 [shape = 'u32[144,128]{1,0:T(1,128)}', space=vmem, size = 0x12000, scoped, tag = 'internal scratch']
  #allocation2 [shape = 'bf16[10,18,128]{2,1,0:T(8,128)(2,1)}', space=vmem, size = 0xf000, scoped, tag = 'scratch operand']
  %s0 = inlined_call_operand.hbm [shape: f32[2,16,16,128], index: 0, kind: input, shape index: {}]
  %s1 = inlined_call_operand.hbm [shape: bf16[128,128], index: 1, kind: input, shape index: {}]
  %s2 = inlined_call_operand.vmem [shape: f32[1,128], index: 2, kind: input, shape index: {}]
  %s3 = inlined_call_operand.hbm [shape: bf16[3,3,128], index: 3, kind: input, shape index: {}]
  %s4 = inlined_call_operand.vmem [shape: f32[1,128], index: 4, kind: input, shape index: {}]
  %s5 = inlined_call_operand.hbm [shape: bf16[128,128], index: 5, kind: input, shape index: {}]
  %s6 = inlined_call_operand.vmem [shape: f32[1,128], index: 6, kind: input, shape index: {}]
  %s7 = inlined_call_operand.hbm [shape: f32[2,16,16,128], index: 7, kind: output, shape index: {}]
  %s8 = sld [smem:[#allocation0]]
  $region85: #{tpu_custom_call.1} parent=0
    _
  %s10 = ssub.s32 1, %s8
  %s11 = scalar_select 0, %s10, %s8
  $region1: #{tpu_custom_call.1} parent=0
    #allocation3 [shape = 'u8[262144]{0}', space=vmem, size = 0x40000, scoped, tag = 'input window, operand 0']
    #allocation4 [shape = 's32[2]{0}', space=sflag, size = 0x8, scoped, tag = 'scoped memory for tpu_custom_call.1']
    #allocation5 [shape = 's32[2]{0}', space=sflag, size = 0x8, scoped, tag = 'scoped memory for tpu_custom_call.1']
    #allocation6 [shape = 'u8[32768]{0}', space=vmem, size = 0x8000, scoped, tag = 'input window, operand 1, single buffered']
    #allocation7 [shape = 's32[1]{0}', space=sflag, size = 0x4, scoped, tag = 'scoped memory for tpu_custom_call.1']
    #allocation8 [shape = 'u8[3072]{0}', space=vmem, size = 0xc00, scoped, tag = 'input window, operand 3, single buffered']
    #allocation9 [shape = 'u8[32768]{0}', space=vmem, size = 0x8000, scoped, tag = 'input window, operand 5, single buffered']
    #allocation10 [shape = 's32[1]{0}', space=sflag, size = 0x4, scoped, tag = 'scoped memory for tpu_custom_call.1']
    #allocation11 [shape = 'u8[131072]{0}', space=vmem, size = 0x20000, scoped, tag = 'output window, operand 0']
    %12 = vsyncpa [#allocation4], 0
    %s13 = scalar_lea.sflag [#allocation4], 1
    %14 = vsyncpa %s13, 0
    %15 = vsyncpa [#allocation7], 0
    %16 = vsyncpa [#allocation10], 0
    %17 = vsyncpa [#allocation5], 0
    %s18 = scalar_lea.sflag [#allocation5], 1
    %19 = vsyncpa %s18, 0
    loop: start=0, step=1, limit=6
    $region2: #{tpu_custom_call.1} parent=1 // loop_pre_header
      _
    $region3: #{tpu_custom_call.1} parent=1 // loop_header
      %s21 = sphi 0, %s25
      %p22 = scmp.ge.s32.totalorder %s21, 6
      %s28 = sphi 0, %s40
      %s29 = sphi 0, %s36
      %s30 = sphi 0, %s28
      %s31 = sphi 0, %s29
      %s32 = sphi 0, %s30
      %s33 = sphi 0, %s31
      %s43 = sphi 0, %s45
      %s46 = sphi 0, %s43
      %s47 = sphi 0, %s46
      %s63 = sphi 0, %s47
      %s67 = sphi 0, %s67
      %s69 = sphi 0, %s67
      %s70 = sphi 0, %s69
      %s84 = sphi 0, %s70
      %s88 = sphi 0, %s88
      %s90 = sphi 0, %s88
      %s91 = sphi 0, %s90
      %s105 = sphi 0, %s91
      %s109 = sphi 0, %s109
      %s111 = sphi 0, %s109
      %s112 = sphi 0, %s111
      %s126 = sphi 0, %s112
      %s130 = sphi 0, %s130
      %s132 = sphi 0, %s130
      %s133 = sphi 0, %s132
      %s147 = sphi 0, %s133
      %s151 = sphi 0, %s151
      %s153 = sphi 0, %s151
      %s154 = sphi 0, %s153
      %s168 = sphi 0, %s154
      %s172 = sphi 0, %s172
      %s174 = sphi 0, %s172
      %s175 = sphi 0, %s174
      %s189 = sphi 0, %s175
      %s197 = sphi 0, %s199
      %s200 = sphi 0, %s197
      %s201 = sphi 0, %s200
      %s217 = sphi 0, %s201
    $region4: #{tpu_custom_call.1} parent=1 // loop_header_branch
      %24 = sbr.rel (%p22) target = $region8
    $region5: #{tpu_custom_call.1} parent=1 // loop_body
      %s26 = ssub.s32 %s21, 1
      %s27 = ssub.s32 %s21, 2
      %s34 = sadd.s32 1, %s29
      %p35 = scmp.ge.s32.totalorder %s34, 2
      %s36 = scalar_select %p35, 0, %s34
      %s37 = sadd.s32 1, %s28
      %s38 = scalar_select %p35, %s37, %s28
      %p39 = scmp.ge.s32.totalorder %s38, 2
      %s40 = scalar_select %p39, 0, %s38
      %s41 = ssub.s32 %s28, %s40
      %p42 = scmp.eq.s32.totalorder %s41, 0
      %s44 = sadd.s32 %s43, 1
      %s45 = scalar_select %p42, %s43, %s44
      %p48 = pneg %p42
      %p49 = scmp.eq.s32.totalorder %s21, 3
      %p50 = por %p48, %p49
      %p51 = scmp.ne.s32.totalorder %s43, %s46
      %p52 = scmp.eq.s32.totalorder %s21, 0
      %p53 = por %p51, %p52
      %p54 = scmp.ne.s32.totalorder %s43, %s46
      %p55 = scmp.eq.s32.totalorder %s26, 3
      %p56 = por %p54, %p55
      %p57 = scmp.ne.s32.totalorder %s46, %s47
      %p58 = scmp.eq.s32.totalorder %s26, 0
      %p59 = por %p57, %p58
      %p60 = scmp.ne.s32.totalorder %s46, %s47
      %p61 = scmp.eq.s32.totalorder %s27, 3
      %p62 = por %p60, %p61
      %p64 = scmp.ne.s32.totalorder %s47, %s63
      %p65 = scmp.eq.s32.totalorder %s27, 0
      %p66 = por %p64, %p65
      %s68 = sadd.s32 %s67, 1
      %p71 = scmp.eq.s32.totalorder %s21, 3
      %p72 = scmp.ne.s32.totalorder %s67, %s69
      %p73 = scmp.eq.s32.totalorder %s21, 0
      %p74 = por %p72, %p73
      %p75 = scmp.ne.s32.totalorder %s67, %s69
      %p76 = scmp.eq.s32.totalorder %s26, 3
      %p77 = por %p75, %p76
      %p78 = scmp.ne.s32.totalorder %s69, %s70
      %p79 = scmp.eq.s32.totalorder %s26, 0
      %p80 = por %p78, %p79
      %p81 = scmp.ne.s32.totalorder %s69, %s70
      %p82 = scmp.eq.s32.totalorder %s27, 3
      %p83 = por %p81, %p82
      %p85 = scmp.ne.s32.totalorder %s70, %s84
      %p86 = scmp.eq.s32.totalorder %s27, 0
      %p87 = por %p85, %p86
      %s89 = sadd.s32 %s88, 1
      %p92 = scmp.eq.s32.totalorder %s21, 3
      %p93 = scmp.ne.s32.totalorder %s88, %s90
      %p94 = scmp.eq.s32.totalorder %s21, 0
      %p95 = por %p93, %p94
      %p96 = scmp.ne.s32.totalorder %s88, %s90
      %p97 = scmp.eq.s32.totalorder %s26, 3
      %p98 = por %p96, %p97
      %p99 = scmp.ne.s32.totalorder %s90, %s91
      %p100 = scmp.eq.s32.totalorder %s26, 0
      %p101 = por %p99, %p100
      %p102 = scmp.ne.s32.totalorder %s90, %s91
      %p103 = scmp.eq.s32.totalorder %s27, 3
      %p104 = por %p102, %p103
      %p106 = scmp.ne.s32.totalorder %s91, %s105
      %p107 = scmp.eq.s32.totalorder %s27, 0
      %p108 = por %p106, %p107
      %s110 = sadd.s32 %s109, 1
      %p113 = scmp.eq.s32.totalorder %s21, 3
      %p114 = scmp.ne.s32.totalorder %s109, %s111
      %p115 = scmp.eq.s32.totalorder %s21, 0
      %p116 = por %p114, %p115
      %p117 = scmp.ne.s32.totalorder %s109, %s111
      %p118 = scmp.eq.s32.totalorder %s26, 3
      %p119 = por %p117, %p118
      %p120 = scmp.ne.s32.totalorder %s111, %s112
      %p121 = scmp.eq.s32.totalorder %s26, 0
      %p122 = por %p120, %p121
      %p123 = scmp.ne.s32.totalorder %s111, %s112
      %p124 = scmp.eq.s32.totalorder %s27, 3
      %p125 = por %p123, %p124
      %p127 = scmp.ne.s32.totalorder %s112, %s126
      %p128 = scmp.eq.s32.totalorder %s27, 0
      %p129 = por %p127, %p128
      %s131 = sadd.s32 %s130, 1
      %p134 = scmp.eq.s32.totalorder %s21, 3
      %p135 = scmp.ne.s32.totalorder %s130, %s132
      %p136 = scmp.eq.s32.totalorder %s21, 0
      %p137 = por %p135, %p136
      %p138 = scmp.ne.s32.totalorder %s130, %s132
      %p139 = scmp.eq.s32.totalorder %s26, 3
      %p140 = por %p138, %p139
      %p141 = scmp.ne.s32.totalorder %s132, %s133
      %p142 = scmp.eq.s32.totalorder %s26, 0
      %p143 = por %p141, %p142
      %p144 = scmp.ne.s32.totalorder %s132, %s133
      %p145 = scmp.eq.s32.totalorder %s27, 3
      %p146 = por %p144, %p145
      %p148 = scmp.ne.s32.totalorder %s133, %s147
      %p149 = scmp.eq.s32.totalorder %s27, 0
      %p150 = por %p148, %p149
      %s152 = sadd.s32 %s151, 1
      %p155 = scmp.eq.s32.totalorder %s21, 3
      %p156 = scmp.ne.s32.totalorder %s151, %s153
      %p157 = scmp.eq.s32.totalorder %s21, 0
      %p158 = por %p156, %p157
      %p159 = scmp.ne.s32.totalorder %s151, %s153
      %p160 = scmp.eq.s32.totalorder %s26, 3
      %p161 = por %p159, %p160
      %p162 = scmp.ne.s32.totalorder %s153, %s154
      %p163 = scmp.eq.s32.totalorder %s26, 0
      %p164 = por %p162, %p163
      %p165 = scmp.ne.s32.totalorder %s153, %s154
      %p166 = scmp.eq.s32.totalorder %s27, 3
      %p167 = por %p165, %p166
      %p169 = scmp.ne.s32.totalorder %s154, %s168
      %p170 = scmp.eq.s32.totalorder %s27, 0
      %p171 = por %p169, %p170
      %s173 = sadd.s32 %s172, 1
      %p176 = scmp.eq.s32.totalorder %s21, 3
      %p177 = scmp.ne.s32.totalorder %s172, %s174
      %p178 = scmp.eq.s32.totalorder %s21, 0
      %p179 = por %p177, %p178
      %p180 = scmp.ne.s32.totalorder %s172, %s174
      %p181 = scmp.eq.s32.totalorder %s26, 3
      %p182 = por %p180, %p181
      %p183 = scmp.ne.s32.totalorder %s174, %s175
      %p184 = scmp.eq.s32.totalorder %s26, 0
      %p185 = por %p183, %p184
      %p186 = scmp.ne.s32.totalorder %s174, %s175
      %p187 = scmp.eq.s32.totalorder %s27, 3
      %p188 = por %p186, %p187
      %p190 = scmp.ne.s32.totalorder %s175, %s189
      %p191 = scmp.eq.s32.totalorder %s27, 0
      %p192 = por %p190, %p191
      %s193 = ssub.s32 %s28, %s40
      %s194 = ssub.s32 %s29, %s36
      %s195 = sor.u32 %s193, %s194
      %p196 = scmp.eq.s32.totalorder %s195, 0
      %s198 = sadd.s32 %s197, 1
      %s199 = scalar_select %p196, %s197, %s198
      %p202 = pneg %p196
      %p203 = scmp.eq.s32.totalorder %s21, 3
      %p204 = por %p202, %p203
      %p205 = scmp.ne.s32.totalorder %s197, %s200
      %p206 = scmp.eq.s32.totalorder %s21, 0
      %p207 = por %p205, %p206
      %p208 = scmp.ne.s32.totalorder %s197, %s200
      %p209 = scmp.eq.s32.totalorder %s26, 3
      %p210 = por %p208, %p209
      %p211 = scmp.ne.s32.totalorder %s200, %s201
      %p212 = scmp.eq.s32.totalorder %s26, 0
      %p213 = por %p211, %p212
      %p214 = scmp.ne.s32.totalorder %s200, %s201
      %p215 = scmp.eq.s32.totalorder %s27, 3
      %p216 = por %p214, %p215
      %p218 = scmp.ne.s32.totalorder %s201, %s217
      %p219 = scmp.eq.s32.totalorder %s27, 0
      %p220 = por %p218, %p219
      %p221 = scmp.le.s32.totalorder 1, %s21
      %p222 = scmp.lt.s32.totalorder %s21, 5
      %p223 = pnand %p221, %p222
      %p224 = pneg %p223
      // Predicated region
      $region9: #{tpu_custom_call.1} parent=5 // pred_check
        _
      $region10: #{tpu_custom_call.1} parent=5 // pred_check_branch
        %226 = sbr.rel (%p223) target = $region12
      $region11: #{tpu_custom_call.1} parent=5 // pred_region
        %s227 = ssub.s32 %s21, 1
        // Predicated region
        $region13: #{tpu_custom_call.1} parent=11 // pred_check
          %p228 = pneg %p80
        $region14: #{tpu_custom_call.1} parent=11 // pred_check_branch
          %230 = sbr.rel (%p228) target = $region16
        $region15: #{tpu_custom_call.1} parent=11 // pred_region
          %s232 = ssub.s32 1024, 1024
          %233 = vsyncadd [#allocation7], %s232
          %s234 = sshll.u32 [#allocation6], 4
          %s235 = int_to_ptr.vmem [resolvable:$true] %s234
          %240 = dma.hbm_to_vmem [thread:$0]  %s1, 1024, %s235, [#allocation7], 64, 64, 4
        $region16: #{tpu_custom_call.1} parent=11 // pred_fallthru
          _
        // Predicated region
        $region17: #{tpu_custom_call.1} parent=11 // pred_check
          %p241 = pneg %p101
        $region18: #{tpu_custom_call.1} parent=11 // pred_check_branch
          %243 = sbr.rel (%p241) target = $region20
        $region19: #{tpu_custom_call.1} parent=11 // pred_region
          _
        $region20: #{tpu_custom_call.1} parent=11 // pred_fallthru
          _
        // Predicated region
        $region21: #{tpu_custom_call.1} parent=11 // pred_check
          %p244 = pneg %p122
        $region22: #{tpu_custom_call.1} parent=11 // pred_check_branch
          %246 = sbr.rel (%p244) target = $region24
        $region23: #{tpu_custom_call.1} parent=11 // pred_region
          %s248 = ssub.s32 96, 96
          %249 = vsyncadd [#allocation7], %s248
          %s250 = sshll.u32 [#allocation8], 4
          %s251 = int_to_ptr.vmem [resolvable:$true] %s250
          %256 = dma.hbm_to_vmem [thread:$0]  %s3, 96, %s251, [#allocation7], 32, 32, 2
        $region24: #{tpu_custom_call.1} parent=11 // pred_fallthru
          _
        // Predicated region
        $region25: #{tpu_custom_call.1} parent=11 // pred_check
          %p257 = pneg %p143
        $region26: #{tpu_custom_call.1} parent=11 // pred_check_branch
          %259 = sbr.rel (%p257) target = $region28
        $region27: #{tpu_custom_call.1} parent=11 // pred_region
          _
        $region28: #{tpu_custom_call.1} parent=11 // pred_fallthru
          _
        // Predicated region
        $region29: #{tpu_custom_call.1} parent=11 // pred_check
          %p260 = pneg %p164
        $region30: #{tpu_custom_call.1} parent=11 // pred_check_branch
          %262 = sbr.rel (%p260) target = $region32
        $region31: #{tpu_custom_call.1} parent=11 // pred_region
          %s264 = ssub.s32 1024, 1024
          %265 = vsyncadd [#allocation10], %s264
          %s266 = sshll.u32 [#allocation9], 4
          %s267 = int_to_ptr.vmem [resolvable:$true] %s266
          %272 = dma.hbm_to_vmem [thread:$0]  %s5, 1024, %s267, [#allocation10], 64, 64, 4
        $region32: #{tpu_custom_call.1} parent=11 // pred_fallthru
          _
        // Predicated region
        $region33: #{tpu_custom_call.1} parent=11 // pred_check
          %p273 = pneg %p185
        $region34: #{tpu_custom_call.1} parent=11 // pred_check_branch
          %275 = sbr.rel (%p273) target = $region36
        $region35: #{tpu_custom_call.1} parent=11 // pred_region
          _
        $region36: #{tpu_custom_call.1} parent=11 // pred_fallthru
          _
      $region12: #{tpu_custom_call.1} parent=5 // pred_fallthru
        _
      %p276 = scmp.lt.s32.totalorder %s21, 4
      // Predicated region
      $region37: #{tpu_custom_call.1} parent=5 // pred_check
        %p277 = pneg %p276
      $region38: #{tpu_custom_call.1} parent=5 // pred_check_branch
        %279 = sbr.rel (%p277) target = $region40
      $region39: #{tpu_custom_call.1} parent=5 // pred_region
        // Predicated region
        $region41: #{tpu_custom_call.1} parent=39 // pred_check
          %p280 = pneg %p53
        $region42: #{tpu_custom_call.1} parent=39 // pred_check_branch
          %282 = sbr.rel (%p280) target = $region44
        $region43: #{tpu_custom_call.1} parent=39 // pred_region
          %s283 = sand.u32 %s43, 1
          %s284 = scalar_lea.sflag [#allocation4], %s283
          %s285 = sand.u32 %s43, 1
          %s286 = smul.addr %s285, 256
          %s287 = scalar_lea.vmem [#allocation3], %s286
          %s289 = ssub.s32 4096, 4096
          %290 = vsyncadd %s284, %s289
          %s291 = smul.addr %s28, 32
          %s292 = smul.addr %s291, 128
          %s293 = scalar_lea.hbm %s0, %s292
          %s294 = sshll.u32 %s287, 4
          %s295 = int_to_ptr.vmem [resolvable:$true] %s294
          %300 = dma.hbm_to_vmem [thread:$0]  %s293, 4096, %s295, %s284, 128, 128, 8
        $region44: #{tpu_custom_call.1} parent=39 // pred_fallthru
          _
      $region40: #{tpu_custom_call.1} parent=5 // pred_fallthru
        _
      %p301 = scmp.le.s32.totalorder 1, %s21
      %p302 = scmp.lt.s32.totalorder %s21, 5
      %p303 = pnand %p301, %p302
      %p304 = pneg %p303
      // Predicated region
      $region45: #{tpu_custom_call.1} parent=5 // pred_check
        _
      $region46: #{tpu_custom_call.1} parent=5 // pred_check_branch
        %306 = sbr.rel (%p303) target = $region48
      $region47: #{tpu_custom_call.1} parent=5 // pred_region
        %s307 = ssub.s32 %s21, 1
        %s308 = sand.u32 %s46, 1
        %s309 = scalar_lea.sflag [#allocation4], %s308
        %s310 = sand.u32 %s46, 1
        %s311 = smul.addr %s310, 256
        %s312 = scalar_lea.vmem [#allocation3], %s311
        // Predicated region
        $region49: #{tpu_custom_call.1} parent=47 // pred_check
          %p313 = pneg %p59
        $region50: #{tpu_custom_call.1} parent=47 // pred_check_branch
          %315 = sbr.rel (%p313) target = $region52
        $region51: #{tpu_custom_call.1} parent=47 // pred_region
          %316 = dma.done %s309, 4096
        $region52: #{tpu_custom_call.1} parent=47 // pred_fallthru
          _
        // Predicated region
        $region53: #{tpu_custom_call.1} parent=47 // pred_check
          %p317 = pneg %p80
        $region54: #{tpu_custom_call.1} parent=47 // pred_check_branch
          %319 = sbr.rel (%p317) target = $region56
        $region55: #{tpu_custom_call.1} parent=47 // pred_region
          %320 = dma.done [#allocation7], 1024
        $region56: #{tpu_custom_call.1} parent=47 // pred_fallthru
          _
        // Predicated region
        $region57: #{tpu_custom_call.1} parent=47 // pred_check
          %p321 = pneg %p122
        $region58: #{tpu_custom_call.1} parent=47 // pred_check_branch
          %323 = sbr.rel (%p321) target = $region60
        $region59: #{tpu_custom_call.1} parent=47 // pred_region
          %324 = dma.done [#allocation7], 96
        $region60: #{tpu_custom_call.1} parent=47 // pred_fallthru
          _
        // Predicated region
        $region61: #{tpu_custom_call.1} parent=47 // pred_check
          %p325 = pneg %p164
        $region62: #{tpu_custom_call.1} parent=47 // pred_check_branch
          %327 = sbr.rel (%p325) target = $region64
        $region63: #{tpu_custom_call.1} parent=47 // pred_region
          %328 = dma.done [#allocation10], 1024
        $region64: #{tpu_custom_call.1} parent=47 // pred_fallthru
          _
        %s329 = sand.u32 %s46, 1
        %s330 = scalar_lea.sflag [#allocation4], %s329
        %s331 = sand.u32 %s46, 1
        %s332 = smul.addr %s331, 256
        %s333 = scalar_lea.vmem [#allocation3], %s332
        %p334 = pneg %p59
        %p335 = pneg %p56
        %p336 = pneg %p80
        %p337 = pneg %p77
        %p338 = pneg %p101
        %p339 = pneg %p98
        %p340 = pneg %p122
        %p341 = pneg %p119
        %p342 = pneg %p143
        %p343 = pneg %p140
        %p344 = pneg %p164
        %p345 = pneg %p161
        %p346 = pneg %p185
        %p347 = pneg %p182
        %p348 = pneg %p213
        %p349 = pneg %p210
        %s350 = sand.u32 %s200, 1
        %s351 = scalar_lea.sflag [#allocation5], %s350
        %s352 = sand.u32 %s200, 1
        %s353 = smul.addr %s352, 128
        %s354 = scalar_lea.vmem [#allocation11], %s353
        %s355 = smul.u32 8, %s31
        %p357 = scmp.eq.s32.totalorder %s31, 0
        // Predicated region
        $region65: #{tpu_custom_call.1} parent=47 // pred_check
          %p358 = pneg %p357
        $region66: #{tpu_custom_call.1} parent=47 // pred_check_branch
          %360 = sbr.rel (%p358) target = $region68
        $region67: #{tpu_custom_call.1} parent=47 // pred_region
          %361 = vst [vmem:[#allocation2] sm:$0xf] 0
          %362 = vst [vmem:[#allocation2 + $0x4] sm:$0xf] 0
          %363 = vst [vmem:[#allocation2 + $0x8] sm:$0x1] 0
          %v364 = vld [vmem:[%s312] sm:$0xff]
          %v365 = vld [vmem:[%s312 + $0x8] sm:$0xff]
          %v366 = vld [vmem:[%s312 + $0x10] sm:$0xff]
          %v367 = vld [vmem:[%s312 + $0x18] sm:$0xff]
          %v368 = vld [vmem:[%s312 + $0x20] sm:$0xff]
          %v369 = vld [vmem:[%s312 + $0x28] sm:$0xff]
          %v370 = vld [vmem:[%s312 + $0x30] sm:$0xff]
          %v371 = vld [vmem:[%s312 + $0x38] sm:$0xff]
          %v372 = vld [vmem:[%s312 + $0x40] sm:$0xff]
          %v373 = vld [vmem:[%s312 + $0x48] sm:$0xff]
          %v374 = vld [vmem:[%s312 + $0x50] sm:$0xff]
          %v375 = vld [vmem:[%s312 + $0x58] sm:$0xff]
          %v376 = vld [vmem:[%s312 + $0x60] sm:$0xff]
          %v377 = vld [vmem:[%s312 + $0x68] sm:$0xff]
          %v378 = vld [vmem:[%s312 + $0x70] sm:$0xff]
          %v379 = vld [vmem:[%s312 + $0x78] sm:$0xff]
          %v380 = vld [vmem:[%s312 + $0x80] sm:$0xff]
          %v381 = vld [vmem:[%s312 + $0x88] sm:$0xff]
          %v382 = vpack.c.bf16 %v365, %v364
          %v383 = vpack.c.bf16 %v367, %v366
          %v384 = vpack.c.bf16 %v369, %v368
          %v385 = vpack.c.bf16 %v371, %v370
          %v386 = vpack.c.bf16 %v373, %v372
          %v387 = vpack.c.bf16 %v375, %v374
          %v388 = vpack.c.bf16 %v377, %v376
          %v389 = vpack.c.bf16 %v379, %v378
          %v390 = vpack.c.bf16 %v381, %v380
          %v391 = vld [vmem:[#allocation6] sm:$0xf]
          %v392 = vld [vmem:[#allocation6 + $0x4] sm:$0xf]
          %v393 = vld [vmem:[#allocation6 + $0x8] sm:$0xf]
          %v394 = vld [vmem:[#allocation6 + $0xc] sm:$0xf]
          %v395 = vld [vmem:[#allocation6 + $0x10] sm:$0xf]
          %v396 = vld [vmem:[#allocation6 + $0x14] sm:$0xf]
          %v397 = vld [vmem:[#allocation6 + $0x18] sm:$0xf]
          %v398 = vld [vmem:[#allocation6 + $0x1c] sm:$0xf]
          %v399 = vld [vmem:[#allocation6 + $0x20] sm:$0xf]
          %v400 = vld [vmem:[#allocation6 + $0x24] sm:$0xf]
          %v401 = vld [vmem:[#allocation6 + $0x28] sm:$0xf]
          %v402 = vld [vmem:[#allocation6 + $0x2c] sm:$0xf]
          %v403 = vld [vmem:[#allocation6 + $0x30] sm:$0xf]
          %v404 = vld [vmem:[#allocation6 + $0x34] sm:$0xf]
          %v405 = vld [vmem:[#allocation6 + $0x38] sm:$0xf]
          %v406 = vld [vmem:[#allocation6 + $0x3c] sm:$0xf]
          %v407 = vld [vmem:[%s2] sm:$0x1]
          %v409 = vlaneseq
          %v410 = vshrl.u32 %v409, 7
          %v411 = vsub.s32 0, %v410
          %v412 = vrot.slane %v407, %v411
          %v430 = vunpack.c.l.b16 %v391
          %v431 = vunpack.c.l.b16 %v392
          %v432 = vunpack.c.l.b16 %v393
          %v433 = vunpack.c.l.b16 %v394
          %v434 = vunpack.c.l.b16 %v395
          %v435 = vunpack.c.l.b16 %v396
          %v436 = vunpack.c.l.b16 %v397
          %v437 = vunpack.c.l.b16 %v398
          %v438 = vunpack.c.l.b16 %v399
          %v439 = vunpack.c.l.b16 %v400
          %v440 = vunpack.c.l.b16 %v401
          %v441 = vunpack.c.l.b16 %v402
          %v442 = vunpack.c.l.b16 %v403
          %v443 = vunpack.c.l.b16 %v404
          %v444 = vunpack.c.l.b16 %v405
          %v445 = vunpack.c.l.b16 %v406
          %v446 = vpack.c.b16 %v431, %v430
          %v447 = vpack.c.b16 %v433, %v432
          %v448 = vpack.c.b16 %v435, %v434
          %v449 = vpack.c.b16 %v437, %v436
          %v450 = vpack.c.b16 %v439, %v438
          %v451 = vpack.c.b16 %v441, %v440
          %v452 = vpack.c.b16 %v443, %v442
          %v453 = vpack.c.b16 %v445, %v444
          %462 = vmatprep.subr.bf16.mxu0 0
          %463 = vmatpush1.bf16.msra.mxu0 %v453
          %464 = vmatprep.subr.bf16.mxu0 0
          %465 = vmatpush1.bf16.msra.mxu0 %v452
          %466 = vmatprep.subr.bf16.mxu0 0
          %467 = vmatpush1.bf16.msra.mxu0 %v451
          %468 = vmatprep.subr.bf16.mxu0 0
          %469 = vmatpush1.bf16.msra.mxu0 %v450
          %470 = vmatprep.subr.bf16.mxu0 0
          %471 = vmatpush1.bf16.msra.mxu0 %v449
          %472 = vmatprep.subr.bf16.mxu0 0
          %473 = vmatpush1.bf16.msra.mxu0 %v448
          %474 = vmatprep.subr.bf16.mxu0 0
          %475 = vmatpush1.bf16.msra.mxu0 %v447
          %476 = vmatprep.subr.bf16.mxu0 0
          %477 = vmatpush1.bf16.msra.mxu0 %v446
          %478 = vmatprep.subr.bf16.mxu0 0
          %479 = vmatpush2.bf16.msra.mxu0 0
          %480 = vmatprep.subr.bf16.mxu0 0
          %481 = vmatpush2.bf16.msra.mxu0 0
          %482 = vmatprep.subr.bf16.mxu0 0
          %483 = vmatpush2.bf16.msra.mxu0 0
          %484 = vmatprep.subr.bf16.mxu0 0
          %485 = vmatpush2.bf16.msra.mxu0 0
          %486 = vmatprep.subr.bf16.mxu0 0
          %487 = vmatpush2.bf16.msra.mxu0 0
          %488 = vmatprep.subr.bf16.mxu0 0
          %489 = vmatpush2.bf16.msra.mxu0 0
          %490 = vmatprep.subr.bf16.mxu0 0
          %491 = vmatpush2.bf16.msra.mxu0 0
          %492 = vmatprep.subr.bf16.mxu0 0
          %493 = vmatpush2.bf16.msra.mxu0 0
          %494 = vmatprep.mubr.bf16.mxu0 0
          %495 = vmatmul.mubr.bf16.gmra.mxu0 %v382
          %v496 = vpop.f32.mrf.mxu0
          %v497 = vadd.f32 %v412, %v496
          %v498 = vpop.f32.mrf.mxu0
          %v499 = vpop.f32.mrf.mxu0
          %v500 = vadd.f32 %v412, %v499
          %v501 = vpop.f32.mrf.mxu0
          %502 = vmatprep.mubr.bf16.mxu0 0
          %503 = vmatmul.mubr.bf16.gmra.mxu0 %v383
          %v504 = vpop.f32.mrf.mxu0
          %v505 = vadd.f32 %v412, %v504
          %v506 = vpop.f32.mrf.mxu0
          %v507 = vpop.f32.mrf.mxu0
          %v508 = vadd.f32 %v412, %v507
          %v509 = vpop.f32.mrf.mxu0
          %510 = vmatprep.mubr.bf16.mxu0 0
          %511 = vmatmul.mubr.bf16.gmra.mxu0 %v384
          %v512 = vpop.f32.mrf.mxu0
          %v513 = vadd.f32 %v412, %v512
          %v514 = vpop.f32.mrf.mxu0
          %v515 = vpop.f32.mrf.mxu0
          %v516 = vadd.f32 %v412, %v515
          %v517 = vpop.f32.mrf.mxu0
          %518 = vmatprep.mubr.bf16.mxu0 0
          %519 = vmatmul.mubr.bf16.gmra.mxu0 %v385
          %v520 = vpop.f32.mrf.mxu0
          %v521 = vadd.f32 %v412, %v520
          %v522 = vpop.f32.mrf.mxu0
          %v523 = vpop.f32.mrf.mxu0
          %v524 = vadd.f32 %v412, %v523
          %v525 = vpop.f32.mrf.mxu0
          %526 = vmatprep.mubr.bf16.mxu0 0
          %527 = vmatmul.mubr.bf16.gmra.mxu0 %v386
          %v528 = vpop.f32.mrf.mxu0
          %v529 = vadd.f32 %v412, %v528
          %v530 = vpop.f32.mrf.mxu0
          %v531 = vpop.f32.mrf.mxu0
          %v532 = vadd.f32 %v412, %v531
          %v533 = vpop.f32.mrf.mxu0
          %534 = vmatprep.mubr.bf16.mxu0 0
          %535 = vmatmul.mubr.bf16.gmra.mxu0 %v387
          %v536 = vpop.f32.mrf.mxu0
          %v537 = vadd.f32 %v412, %v536
          %v538 = vpop.f32.mrf.mxu0
          %v539 = vpop.f32.mrf.mxu0
          %v540 = vadd.f32 %v412, %v539
          %v541 = vpop.f32.mrf.mxu0
          %542 = vmatprep.mubr.bf16.mxu0 0
          %543 = vmatmul.mubr.bf16.gmra.mxu0 %v388
          %v544 = vpop.f32.mrf.mxu0
          %v545 = vadd.f32 %v412, %v544
          %v546 = vpop.f32.mrf.mxu0
          %v547 = vpop.f32.mrf.mxu0
          %v548 = vadd.f32 %v412, %v547
          %v549 = vpop.f32.mrf.mxu0
          %550 = vmatprep.mubr.bf16.mxu0 0
          %551 = vmatmul.mubr.bf16.gmra.mxu0 %v389
          %v552 = vpop.f32.mrf.mxu0
          %v553 = vadd.f32 %v412, %v552
          %v554 = vpop.f32.mrf.mxu0
          %v555 = vpop.f32.mrf.mxu0
          %v556 = vadd.f32 %v412, %v555
          %v557 = vpop.f32.mrf.mxu0
          %558 = vmatprep.mubr.bf16.mxu0 0
          %559 = vmatmul.mubr.bf16.gmra.mxu0 %v390
          %v560 = vpop.f32.mrf.mxu0
          %v561 = vadd.f32 %v412, %v560
          %v562 = vpop.f32.mrf.mxu0
          %v563 = vpop.f32.mrf.mxu0
          %v564 = vadd.f32 %v412, %v563
          %v565 = vpop.f32.mrf.mxu0
          %566 = vdwg.mxu0
          %v567 = vmax.f32 %v497, 0.0
          %v568 = vmax.f32 %v500, 0.0
          %v569 = vmax.f32 %v505, 0.0
          %v570 = vmax.f32 %v508, 0.0
          %v571 = vmax.f32 %v513, 0.0
          %v572 = vmax.f32 %v516, 0.0
          %v573 = vmax.f32 %v521, 0.0
          %v574 = vmax.f32 %v524, 0.0
          %v575 = vmax.f32 %v529, 0.0
          %v576 = vmax.f32 %v532, 0.0
          %v577 = vmax.f32 %v537, 0.0
          %v578 = vmax.f32 %v540, 0.0
          %v579 = vmax.f32 %v545, 0.0
          %v580 = vmax.f32 %v548, 0.0
          %v581 = vmax.f32 %v553, 0.0
          %v582 = vmax.f32 %v556, 0.0
          %v583 = vmax.f32 %v561, 0.0
          %v584 = vmax.f32 %v564, 0.0
          %v585 = vmin.f32 %v567, 6.0
          %v586 = vmin.f32 %v568, 6.0
          %v587 = vmin.f32 %v569, 6.0
          %v588 = vmin.f32 %v570, 6.0
          %v589 = vmin.f32 %v571, 6.0
          %v590 = vmin.f32 %v572, 6.0
          %v591 = vmin.f32 %v573, 6.0
          %v592 = vmin.f32 %v574, 6.0
          %v593 = vmin.f32 %v575, 6.0
          %v594 = vmin.f32 %v576, 6.0
          %v595 = vmin.f32 %v577, 6.0
          %v596 = vmin.f32 %v578, 6.0
          %v597 = vmin.f32 %v579, 6.0
          %v598 = vmin.f32 %v580, 6.0
          %v599 = vmin.f32 %v581, 6.0
          %v600 = vmin.f32 %v582, 6.0
          %v601 = vmin.f32 %v583, 6.0
          %v602 = vmin.f32 %v584, 6.0
          %v603 = vpack.c.bf16 %v586, %v585
          %v604 = vpack.c.bf16 %v588, %v587
          %v605 = vpack.c.bf16 %v590, %v589
          %v606 = vpack.c.bf16 %v592, %v591
          %v607 = vpack.c.bf16 %v594, %v593
          %v608 = vpack.c.bf16 %v596, %v595
          %v609 = vpack.c.bf16 %v598, %v597
          %v610 = vpack.c.bf16 %v600, %v599
          %v611 = vpack.c.bf16 %v602, %v601
          %v613 = vshrl.u32 %v603, 16
          %v615 = vrot.slane %v613, 7
          %v616 = vshll.u32 %v603, 16
          %v618 = vor.u32 %v615, %v616
          %v620 = vshrl.u32 %v604, 16
          %v622 = vrot.slane %v620, 7
          %v623 = vshll.u32 %v604, 16
          %v625 = vor.u32 %v622, %v623
          %v627 = vshrl.u32 %v605, 16
          %v629 = vrot.slane %v627, 7
          %v630 = vshll.u32 %v605, 16
          %v632 = vor.u32 %v629, %v630
          %v634 = vshrl.u32 %v606, 16
          %v636 = vrot.slane %v634, 7
          %v637 = vshll.u32 %v606, 16
          %v639 = vor.u32 %v636, %v637
          %v641 = vshrl.u32 %v607, 16
          %v643 = vrot.slane %v641, 7
          %v644 = vshll.u32 %v607, 16
          %v646 = vor.u32 %v643, %v644
          %v648 = vshrl.u32 %v608, 16
          %v650 = vrot.slane %v648, 7
          %v651 = vshll.u32 %v608, 16
          %v653 = vor.u32 %v650, %v651
          %v655 = vshrl.u32 %v609, 16
          %v657 = vrot.slane %v655, 7
          %v658 = vshll.u32 %v609, 16
          %v660 = vor.u32 %v657, %v658
          %v662 = vshrl.u32 %v610, 16
          %v664 = vrot.slane %v662, 7
          %v665 = vshll.u32 %v610, 16
          %v667 = vor.u32 %v664, %v665
          %v669 = vshrl.u32 %v611, 16
          %v671 = vrot.slane %v669, 7
          %v672 = vshll.u32 %v611, 16
          %v674 = vor.u32 %v671, %v672
          %vm693 = vcmask 1040384
          %vm694 = vsmask.f32 256
          %vm695 = vmand %vm693, %vm694
          %v696 = vsel %vm695, 0, %v618
          %v697 = vsel %vm695, 0, %v625
          %v698 = vsel %vm695, 0, %v632
          %v699 = vsel %vm695, 0, %v639
          %v700 = vsel %vm695, 0, %v646
          %v701 = vsel %vm695, 0, %v653
          %v702 = vsel %vm695, 0, %v660
          %v703 = vsel %vm695, 0, %v667
          %v704 = vsel %vm695, 0, %v674
          %v705 = vsel %vm695, %v615, 0
          %v706 = vsel %vm695, %v622, 0
          %v707 = vsel %vm695, %v629, 0
          %v708 = vsel %vm695, %v636, 0
          %v709 = vsel %vm695, %v643, 0
          %v710 = vsel %vm695, %v650, 0
          %v711 = vsel %vm695, %v657, 0
          %v712 = vsel %vm695, %v664, 0
          %v713 = vsel %vm695, %v671, 0
          %v732 = vunpack.c.l.b16 %v696
          %v733 = vunpack.c.h.b16 %v696
          %v734 = vunpack.c.l.b16 %v705
          %v735 = vunpack.c.l.b16 %v697
          %v736 = vunpack.c.h.b16 %v697
          %v737 = vunpack.c.l.b16 %v706
          %v738 = vunpack.c.l.b16 %v698
          %v739 = vunpack.c.h.b16 %v698
          %v740 = vunpack.c.l.b16 %v707
          %v741 = vunpack.c.l.b16 %v699
          %v742 = vunpack.c.h.b16 %v699
          %v743 = vunpack.c.l.b16 %v708
          %v744 = vunpack.c.l.b16 %v700
          %v745 = vunpack.c.h.b16 %v700
          %v746 = vunpack.c.l.b16 %v709
          %v747 = vunpack.c.l.b16 %v701
          %v748 = vunpack.c.h.b16 %v701
          %v749 = vunpack.c.l.b16 %v710
          %v750 = vunpack.c.l.b16 %v702
          %v751 = vunpack.c.h.b16 %v702
          %v752 = vunpack.c.l.b16 %v711
          %v753 = vunpack.c.l.b16 %v703
          %v754 = vunpack.c.h.b16 %v703
          %v755 = vunpack.c.l.b16 %v712
          %v756 = vunpack.c.l.b16 %v704
          %v757 = vunpack.c.h.b16 %v704
          %v758 = vunpack.c.l.b16 %v713
          %v759 = vpack.c.b16 %v732, %v732
          %v760 = vpack.c.b16 %v733, %v733
          %v761 = vpack.c.b16 %v734, %v734
          %v762 = vpack.c.b16 %v735, %v735
          %v763 = vpack.c.b16 %v736, %v736
          %v764 = vpack.c.b16 %v737, %v737
          %v765 = vpack.c.b16 %v738, %v738
          %v766 = vpack.c.b16 %v739, %v739
          %v767 = vpack.c.b16 %v740, %v740
          %v768 = vpack.c.b16 %v741, %v741
          %v769 = vpack.c.b16 %v742, %v742
          %v770 = vpack.c.b16 %v743, %v743
          %v771 = vpack.c.b16 %v744, %v744
          %v772 = vpack.c.b16 %v745, %v745
          %v773 = vpack.c.b16 %v746, %v746
          %v774 = vpack.c.b16 %v747, %v747
          %v775 = vpack.c.b16 %v748, %v748
          %v776 = vpack.c.b16 %v749, %v749
          %v777 = vpack.c.b16 %v750, %v750
          %v778 = vpack.c.b16 %v751, %v751
          %v779 = vpack.c.b16 %v752, %v752
          %v780 = vpack.c.b16 %v753, %v753
          %v781 = vpack.c.b16 %v754, %v754
          %v782 = vpack.c.b16 %v755, %v755
          %v783 = vpack.c.b16 %v756, %v756
          %v784 = vpack.c.b16 %v757, %v757
          %v785 = vpack.c.b16 %v758, %v758
          %s813 = scalar_lea.vmem [#allocation2], 12
          %814 = vst [vmem:[%s813] sm:$0xf] %v759
          %815 = vst [vmem:[%s813 + $0x4] sm:$0xf] %v760
          %816 = vst [vmem:[%s813 + $0x8] sm:$0x1] %v761
          %817 = vst [vmem:[%s813 + $0xc] sm:$0xf] %v762
          %818 = vst [vmem:[%s813 + $0x10] sm:$0xf] %v763
          %819 = vst [vmem:[%s813 + $0x14] sm:$0x1] %v764
          %820 = vst [vmem:[%s813 + $0x18] sm:$0xf] %v765
          %821 = vst [vmem:[%s813 + $0x1c] sm:$0xf] %v766
          %822 = vst [vmem:[%s813 + $0x20] sm:$0x1] %v767
          %823 = vst [vmem:[%s813 + $0x24] sm:$0xf] %v768
          %824 = vst [vmem:[%s813 + $0x28] sm:$0xf] %v769
          %825 = vst [vmem:[%s813 + $0x2c] sm:$0x1] %v770
          %826 = vst [vmem:[%s813 + $0x30] sm:$0xf] %v771
          %827 = vst [vmem:[%s813 + $0x34] sm:$0xf] %v772
          %828 = vst [vmem:[%s813 + $0x38] sm:$0x1] %v773
          %829 = vst [vmem:[%s813 + $0x3c] sm:$0xf] %v774
          %830 = vst [vmem:[%s813 + $0x40] sm:$0xf] %v775
          %831 = vst [vmem:[%s813 + $0x44] sm:$0x1] %v776
          %832 = vst [vmem:[%s813 + $0x48] sm:$0xf] %v777
          %833 = vst [vmem:[%s813 + $0x4c] sm:$0xf] %v778
          %834 = vst [vmem:[%s813 + $0x50] sm:$0x1] %v779
          %835 = vst [vmem:[%s813 + $0x54] sm:$0xf] %v780
          %836 = vst [vmem:[%s813 + $0x58] sm:$0xf] %v781
          %837 = vst [vmem:[%s813 + $0x5c] sm:$0x1] %v782
          %838 = vst [vmem:[%s813 + $0x60] sm:$0xf] %v783
          %839 = vst [vmem:[%s813 + $0x64] sm:$0xf] %v784
          %840 = vst [vmem:[%s813 + $0x68] sm:$0x1] %v785
        $region68: #{tpu_custom_call.1} parent=47 // pred_fallthru
          _
        %p841 = scmp.eq.s32.totalorder %s31, 1
        // Predicated region
        $region69: #{tpu_custom_call.1} parent=47 // pred_check
          %p842 = pneg %p841
        $region70: #{tpu_custom_call.1} parent=47 // pred_check_branch
          %844 = sbr.rel (%p842) target = $region72
        $region71: #{tpu_custom_call.1} parent=47 // pred_region
          %s845 = scalar_lea.vmem %s312, 112 [#allocation3]
          %v846 = vld [vmem:[%s845] sm:$0xff]
          %v847 = vld [vmem:[%s845 + $0x8] sm:$0xff]
          %v848 = vld [vmem:[%s845 + $0x10] sm:$0xff]
          %v849 = vld [vmem:[%s845 + $0x18] sm:$0xff]
          %v850 = vld [vmem:[%s845 + $0x20] sm:$0xff]
          %v851 = vld [vmem:[%s845 + $0x28] sm:$0xff]
          %v852 = vld [vmem:[%s845 + $0x30] sm:$0xff]
          %v853 = vld [vmem:[%s845 + $0x38] sm:$0xff]
          %v854 = vld [vmem:[%s845 + $0x40] sm:$0xff]
          %v855 = vld [vmem:[%s845 + $0x48] sm:$0xff]
          %v856 = vld [vmem:[%s845 + $0x50] sm:$0xff]
          %v857 = vld [vmem:[%s845 + $0x58] sm:$0xff]
          %v858 = vld [vmem:[%s845 + $0x60] sm:$0xff]
          %v859 = vld [vmem:[%s845 + $0x68] sm:$0xff]
          %v860 = vld [vmem:[%s845 + $0x70] sm:$0xff]
          %v861 = vld [vmem:[%s845 + $0x78] sm:$0xff]
          %v862 = vld [vmem:[%s845 + $0x80] sm:$0xff]
          %v863 = vld [vmem:[%s845 + $0x88] sm:$0xff]
          %v864 = vpack.c.bf16 %v847, %v846
          %v865 = vpack.c.bf16 %v849, %v848
          %v866 = vpack.c.bf16 %v851, %v850
          %v867 = vpack.c.bf16 %v853, %v852
          %v868 = vpack.c.bf16 %v855, %v854
          %v869 = vpack.c.bf16 %v857, %v856
          %v870 = vpack.c.bf16 %v859, %v858
          %v871 = vpack.c.bf16 %v861, %v860
          %v872 = vpack.c.bf16 %v863, %v862
          %v873 = vld [vmem:[#allocation6] sm:$0xf]
          %v874 = vld [vmem:[#allocation6 + $0x4] sm:$0xf]
          %v875 = vld [vmem:[#allocation6 + $0x8] sm:$0xf]
          %v876 = vld [vmem:[#allocation6 + $0xc] sm:$0xf]
          %v877 = vld [vmem:[#allocation6 + $0x10] sm:$0xf]
          %v878 = vld [vmem:[#allocation6 + $0x14] sm:$0xf]
          %v879 = vld [vmem:[#allocation6 + $0x18] sm:$0xf]
          %v880 = vld [vmem:[#allocation6 + $0x1c] sm:$0xf]
          %v881 = vld [vmem:[#allocation6 + $0x20] sm:$0xf]
          %v882 = vld [vmem:[#allocation6 + $0x24] sm:$0xf]
          %v883 = vld [vmem:[#allocation6 + $0x28] sm:$0xf]
          %v884 = vld [vmem:[#allocation6 + $0x2c] sm:$0xf]
          %v885 = vld [vmem:[#allocation6 + $0x30] sm:$0xf]
          %v886 = vld [vmem:[#allocation6 + $0x34] sm:$0xf]
          %v887 = vld [vmem:[#allocation6 + $0x38] sm:$0xf]
          %v888 = vld [vmem:[#allocation6 + $0x3c] sm:$0xf]
          %v889 = vld [vmem:[%s2] sm:$0x1]
          %v891 = vlaneseq
          %v892 = vshrl.u32 %v891, 7
          %v893 = vsub.s32 0, %v892
          %v894 = vrot.slane %v889, %v893
          %v912 = vunpack.c.l.b16 %v873
          %v913 = vunpack.c.l.b16 %v874
          %v914 = vunpack.c.l.b16 %v875
          %v915 = vunpack.c.l.b16 %v876
          %v916 = vunpack.c.l.b16 %v877
          %v917 = vunpack.c.l.b16 %v878
          %v918 = vunpack.c.l.b16 %v879
          %v919 = vunpack.c.l.b16 %v880
          %v920 = vunpack.c.l.b16 %v881
          %v921 = vunpack.c.l.b16 %v882
          %v922 = vunpack.c.l.b16 %v883
          %v923 = vunpack.c.l.b16 %v884
          %v924 = vunpack.c.l.b16 %v885
          %v925 = vunpack.c.l.b16 %v886
          %v926 = vunpack.c.l.b16 %v887
          %v927 = vunpack.c.l.b16 %v888
          %v928 = vpack.c.b16 %v913, %v912
          %v929 = vpack.c.b16 %v915, %v914
          %v930 = vpack.c.b16 %v917, %v916
          %v931 = vpack.c.b16 %v919, %v918
          %v932 = vpack.c.b16 %v921, %v920
          %v933 = vpack.c.b16 %v923, %v922
          %v934 = vpack.c.b16 %v925, %v924
          %v935 = vpack.c.b16 %v927, %v926
          %944 = vmatprep.subr.bf16.mxu0 0
          %945 = vmatpush1.bf16.msra.mxu0 %v935
          %946 = vmatprep.subr.bf16.mxu0 0
          %947 = vmatpush1.bf16.msra.mxu0 %v934
          %948 = vmatprep.subr.bf16.mxu0 0
          %949 = vmatpush1.bf16.msra.mxu0 %v933
          %950 = vmatprep.subr.bf16.mxu0 0
          %951 = vmatpush1.bf16.msra.mxu0 %v932
          %952 = vmatprep.subr.bf16.mxu0 0
          %953 = vmatpush1.bf16.msra.mxu0 %v931
          %954 = vmatprep.subr.bf16.mxu0 0
          %955 = vmatpush1.bf16.msra.mxu0 %v930
          %956 = vmatprep.subr.bf16.mxu0 0
          %957 = vmatpush1.bf16.msra.mxu0 %v929
          %958 = vmatprep.subr.bf16.mxu0 0
          %959 = vmatpush1.bf16.msra.mxu0 %v928
          %960 = vmatprep.subr.bf16.mxu0 0
          %961 = vmatpush2.bf16.msra.mxu0 0
          %962 = vmatprep.subr.bf16.mxu0 0
          %963 = vmatpush2.bf16.msra.mxu0 0
          %964 = vmatprep.subr.bf16.mxu0 0
          %965 = vmatpush2.bf16.msra.mxu0 0
          %966 = vmatprep.subr.bf16.mxu0 0
          %967 = vmatpush2.bf16.msra.mxu0 0
          %968 = vmatprep.subr.bf16.mxu0 0
          %969 = vmatpush2.bf16.msra.mxu0 0
          %970 = vmatprep.subr.bf16.mxu0 0
          %971 = vmatpush2.bf16.msra.mxu0 0
          %972 = vmatprep.subr.bf16.mxu0 0
          %973 = vmatpush2.bf16.msra.mxu0 0
          %974 = vmatprep.subr.bf16.mxu0 0
          %975 = vmatpush2.bf16.msra.mxu0 0
          %976 = vmatprep.mubr.bf16.mxu0 0
          %977 = vmatmul.mubr.bf16.gmra.mxu0 %v864
          %v978 = vpop.f32.mrf.mxu0
          %v979 = vadd.f32 %v894, %v978
          %v980 = vpop.f32.mrf.mxu0
          %v981 = vpop.f32.mrf.mxu0
          %v982 = vadd.f32 %v894, %v981
          %v983 = vpop.f32.mrf.mxu0
          %984 = vmatprep.mubr.bf16.mxu0 0
          %985 = vmatmul.mubr.bf16.gmra.mxu0 %v865
          %v986 = vpop.f32.mrf.mxu0
          %v987 = vadd.f32 %v894, %v986
          %v988 = vpop.f32.mrf.mxu0
          %v989 = vpop.f32.mrf.mxu0
          %v990 = vadd.f32 %v894, %v989
          %v991 = vpop.f32.mrf.mxu0
          %992 = vmatprep.mubr.bf16.mxu0 0
          %993 = vmatmul.mubr.bf16.gmra.mxu0 %v866
          %v994 = vpop.f32.mrf.mxu0
          %v995 = vadd.f32 %v894, %v994
          %v996 = vpop.f32.mrf.mxu0
          %v997 = vpop.f32.mrf.mxu0
          %v998 = vadd.f32 %v894, %v997
          %v999 = vpop.f32.mrf.mxu0
          %1000 = vmatprep.mubr.bf16.mxu0 0
          %1001 = vmatmul.mubr.bf16.gmra.mxu0 %v867
          %v1002 = vpop.f32.mrf.mxu0
          %v1003 = vadd.f32 %v894, %v1002
          %v1004 = vpop.f32.mrf.mxu0
          %v1005 = vpop.f32.mrf.mxu0
          %v1006 = vadd.f32 %v894, %v1005
          %v1007 = vpop.f32.mrf.mxu0
          %1008 = vmatprep.mubr.bf16.mxu0 0
          %1009 = vmatmul.mubr.bf16.gmra.mxu0 %v868
          %v1010 = vpop.f32.mrf.mxu0
          %v1011 = vadd.f32 %v894, %v1010
          %v1012 = vpop.f32.mrf.mxu0
          %v1013 = vpop.f32.mrf.mxu0
          %v1014 = vadd.f32 %v894, %v1013
          %v1015 = vpop.f32.mrf.mxu0
          %1016 = vmatprep.mubr.bf16.mxu0 0
          %1017 = vmatmul.mubr.bf16.gmra.mxu0 %v869
          %v1018 = vpop.f32.mrf.mxu0
          %v1019 = vadd.f32 %v894, %v1018
          %v1020 = vpop.f32.mrf.mxu0
          %v1021 = vpop.f32.mrf.mxu0
          %v1022 = vadd.f32 %v894, %v1021
          %v1023 = vpop.f32.mrf.mxu0
          %1024 = vmatprep.mubr.bf16.mxu0 0
          %1025 = vmatmul.mubr.bf16.gmra.mxu0 %v870
          %v1026 = vpop.f32.mrf.mxu0
          %v1027 = vadd.f32 %v894, %v1026
          %v1028 = vpop.f32.mrf.mxu0
          %v1029 = vpop.f32.mrf.mxu0
          %v1030 = vadd.f32 %v894, %v1029
          %v1031 = vpop.f32.mrf.mxu0
          %1032 = vmatprep.mubr.bf16.mxu0 0
          %1033 = vmatmul.mubr.bf16.gmra.mxu0 %v871
          %v1034 = vpop.f32.mrf.mxu0
          %v1035 = vadd.f32 %v894, %v1034
          %v1036 = vpop.f32.mrf.mxu0
          %v1037 = vpop.f32.mrf.mxu0
          %v1038 = vadd.f32 %v894, %v1037
          %v1039 = vpop.f32.mrf.mxu0
          %1040 = vmatprep.mubr.bf16.mxu0 0
          %1041 = vmatmul.mubr.bf16.gmra.mxu0 %v872
          %v1042 = vpop.f32.mrf.mxu0
          %v1043 = vadd.f32 %v894, %v1042
          %v1044 = vpop.f32.mrf.mxu0
          %v1045 = vpop.f32.mrf.mxu0
          %v1046 = vadd.f32 %v894, %v1045
          %v1047 = vpop.f32.mrf.mxu0
          %1048 = vdwg.mxu0
          %v1049 = vmax.f32 %v979, 0.0
          %v1050 = vmax.f32 %v982, 0.0
          %v1051 = vmax.f32 %v987, 0.0
          %v1052 = vmax.f32 %v990, 0.0
          %v1053 = vmax.f32 %v995, 0.0
          %v1054 = vmax.f32 %v998, 0.0
          %v1055 = vmax.f32 %v1003, 0.0
          %v1056 = vmax.f32 %v1006, 0.0
          %v1057 = vmax.f32 %v1011, 0.0
          %v1058 = vmax.f32 %v1014, 0.0
          %v1059 = vmax.f32 %v1019, 0.0
          %v1060 = vmax.f32 %v1022, 0.0
          %v1061 = vmax.f32 %v1027, 0.0
          %v1062 = vmax.f32 %v1030, 0.0
          %v1063 = vmax.f32 %v1035, 0.0
          %v1064 = vmax.f32 %v1038, 0.0
          %v1065 = vmax.f32 %v1043, 0.0
          %v1066 = vmax.f32 %v1046, 0.0
          %v1067 = vmin.f32 %v1049, 6.0
          %v1068 = vmin.f32 %v1050, 6.0
          %v1069 = vmin.f32 %v1051, 6.0
          %v1070 = vmin.f32 %v1052, 6.0
          %v1071 = vmin.f32 %v1053, 6.0
          %v1072 = vmin.f32 %v1054, 6.0
          %v1073 = vmin.f32 %v1055, 6.0
          %v1074 = vmin.f32 %v1056, 6.0
          %v1075 = vmin.f32 %v1057, 6.0
          %v1076 = vmin.f32 %v1058, 6.0
          %v1077 = vmin.f32 %v1059, 6.0
          %v1078 = vmin.f32 %v1060, 6.0
          %v1079 = vmin.f32 %v1061, 6.0
          %v1080 = vmin.f32 %v1062, 6.0
          %v1081 = vmin.f32 %v1063, 6.0
          %v1082 = vmin.f32 %v1064, 6.0
          %v1083 = vmin.f32 %v1065, 6.0
          %v1084 = vmin.f32 %v1066, 6.0
          %v1085 = vpack.c.bf16 %v1068, %v1067
          %v1086 = vpack.c.bf16 %v1070, %v1069
          %v1087 = vpack.c.bf16 %v1072, %v1071
          %v1088 = vpack.c.bf16 %v1074, %v1073
          %v1089 = vpack.c.bf16 %v1076, %v1075
          %v1090 = vpack.c.bf16 %v1078, %v1077
          %v1091 = vpack.c.bf16 %v1080, %v1079
          %v1092 = vpack.c.bf16 %v1082, %v1081
          %v1093 = vpack.c.bf16 %v1084, %v1083
          %v1095 = vshrl.u32 %v1085, 16
          %v1097 = vrot.slane %v1095, 7
          %v1098 = vshll.u32 %v1085, 16
          %v1100 = vor.u32 %v1097, %v1098
          %v1102 = vshrl.u32 %v1086, 16
          %v1104 = vrot.slane %v1102, 7
          %v1105 = vshll.u32 %v1086, 16
          %v1107 = vor.u32 %v1104, %v1105
          %v1109 = vshrl.u32 %v1087, 16
          %v1111 = vrot.slane %v1109, 7
          %v1112 = vshll.u32 %v1087, 16
          %v1114 = vor.u32 %v1111, %v1112
          %v1116 = vshrl.u32 %v1088, 16
          %v1118 = vrot.slane %v1116, 7
          %v1119 = vshll.u32 %v1088, 16
          %v1121 = vor.u32 %v1118, %v1119
          %v1123 = vshrl.u32 %v1089, 16
          %v1125 = vrot.slane %v1123, 7
          %v1126 = vshll.u32 %v1089, 16
          %v1128 = vor.u32 %v1125, %v1126
          %v1130 = vshrl.u32 %v1090, 16
          %v1132 = vrot.slane %v1130, 7
          %v1133 = vshll.u32 %v1090, 16
          %v1135 = vor.u32 %v1132, %v1133
          %v1137 = vshrl.u32 %v1091, 16
          %v1139 = vrot.slane %v1137, 7
          %v1140 = vshll.u32 %v1091, 16
          %v1142 = vor.u32 %v1139, %v1140
          %v1144 = vshrl.u32 %v1092, 16
          %v1146 = vrot.slane %v1144, 7
          %v1147 = vshll.u32 %v1092, 16
          %v1149 = vor.u32 %v1146, %v1147
          %v1151 = vshrl.u32 %v1093, 16
          %v1153 = vrot.slane %v1151, 7
          %v1154 = vshll.u32 %v1093, 16
          %v1156 = vor.u32 %v1153, %v1154
          %vm1175 = vcmask 1040384
          %vm1176 = vsmask.f32 256
          %vm1177 = vmand %vm1175, %vm1176
          %v1178 = vsel %vm1177, 0, %v1100
          %v1179 = vsel %vm1177, 0, %v1107
          %v1180 = vsel %vm1177, 0, %v1114
          %v1181 = vsel %vm1177, 0, %v1121
          %v1182 = vsel %vm1177, 0, %v1128
          %v1183 = vsel %vm1177, 0, %v1135
          %v1184 = vsel %vm1177, 0, %v1142
          %v1185 = vsel %vm1177, 0, %v1149
          %v1186 = vsel %vm1177, 0, %v1156
          %v1187 = vsel %vm1177, %v1097, 0
          %v1188 = vsel %vm1177, %v1104, 0
          %v1189 = vsel %vm1177, %v1111, 0
          %v1190 = vsel %vm1177, %v1118, 0
          %v1191 = vsel %vm1177, %v1125, 0
          %v1192 = vsel %vm1177, %v1132, 0
          %v1193 = vsel %vm1177, %v1139, 0
          %v1194 = vsel %vm1177, %v1146, 0
          %v1195 = vsel %vm1177, %v1153, 0
          %v1214 = vunpack.c.l.b16 %v1178
          %v1215 = vunpack.c.h.b16 %v1178
          %v1216 = vunpack.c.l.b16 %v1187
          %v1217 = vunpack.c.l.b16 %v1179
          %v1218 = vunpack.c.h.b16 %v1179
          %v1219 = vunpack.c.l.b16 %v1188
          %v1220 = vunpack.c.l.b16 %v1180
          %v1221 = vunpack.c.h.b16 %v1180
          %v1222 = vunpack.c.l.b16 %v1189
          %v1223 = vunpack.c.l.b16 %v1181
          %v1224 = vunpack.c.h.b16 %v1181
          %v1225 = vunpack.c.l.b16 %v1190
          %v1226 = vunpack.c.l.b16 %v1182
          %v1227 = vunpack.c.h.b16 %v1182
          %v1228 = vunpack.c.l.b16 %v1191
          %v1229 = vunpack.c.l.b16 %v1183
          %v1230 = vunpack.c.h.b16 %v1183
          %v1231 = vunpack.c.l.b16 %v1192
          %v1232 = vunpack.c.l.b16 %v1184
          %v1233 = vunpack.c.h.b16 %v1184
          %v1234 = vunpack.c.l.b16 %v1193
          %v1235 = vunpack.c.l.b16 %v1185
          %v1236 = vunpack.c.h.b16 %v1185
          %v1237 = vunpack.c.l.b16 %v1194
          %v1238 = vunpack.c.l.b16 %v1186
          %v1239 = vunpack.c.h.b16 %v1186
          %v1240 = vunpack.c.l.b16 %v1195
          %v1241 = vpack.c.b16 %v1214, %v1214
          %v1242 = vpack.c.b16 %v1215, %v1215
          %v1243 = vpack.c.b16 %v1216, %v1216
          %v1244 = vpack.c.b16 %v1217, %v1217
          %v1245 = vpack.c.b16 %v1218, %v1218
          %v1246 = vpack.c.b16 %v1219, %v1219
          %v1247 = vpack.c.b16 %v1220, %v1220
          %v1248 = vpack.c.b16 %v1221, %v1221
          %v1249 = vpack.c.b16 %v1222, %v1222
          %v1250 = vpack.c.b16 %v1223, %v1223
          %v1251 = vpack.c.b16 %v1224, %v1224
          %v1252 = vpack.c.b16 %v1225, %v1225
          %v1253 = vpack.c.b16 %v1226, %v1226
          %v1254 = vpack.c.b16 %v1227, %v1227
          %v1255 = vpack.c.b16 %v1228, %v1228
          %v1256 = vpack.c.b16 %v1229, %v1229
          %v1257 = vpack.c.b16 %v1230, %v1230
          %v1258 = vpack.c.b16 %v1231, %v1231
          %v1259 = vpack.c.b16 %v1232, %v1232
          %v1260 = vpack.c.b16 %v1233, %v1233
          %v1261 = vpack.c.b16 %v1234, %v1234
          %v1262 = vpack.c.b16 %v1235, %v1235
          %v1263 = vpack.c.b16 %v1236, %v1236
          %v1264 = vpack.c.b16 %v1237, %v1237
          %v1265 = vpack.c.b16 %v1238, %v1238
          %v1266 = vpack.c.b16 %v1239, %v1239
          %v1267 = vpack.c.b16 %v1240, %v1240
          %1295 = vst [vmem:[#allocation2] sm:$0xf] %v1241
          %1296 = vst [vmem:[#allocation2 + $0x4] sm:$0xf] %v1242
          %1297 = vst [vmem:[#allocation2 + $0x8] sm:$0x1] %v1243
          %1298 = vst [vmem:[#allocation2 + $0xc] sm:$0xf] %v1244
          %1299 = vst [vmem:[#allocation2 + $0x10] sm:$0xf] %v1245
          %1300 = vst [vmem:[#allocation2 + $0x14] sm:$0x1] %v1246
          %1301 = vst [vmem:[#allocation2 + $0x18] sm:$0xf] %v1247
          %1302 = vst [vmem:[#allocation2 + $0x1c] sm:$0xf] %v1248
          %1303 = vst [vmem:[#allocation2 + $0x20] sm:$0x1] %v1249
          %1304 = vst [vmem:[#allocation2 + $0x24] sm:$0xf] %v1250
          %1305 = vst [vmem:[#allocation2 + $0x28] sm:$0xf] %v1251
          %1306 = vst [vmem:[#allocation2 + $0x2c] sm:$0x1] %v1252
          %1307 = vst [vmem:[#allocation2 + $0x30] sm:$0xf] %v1253
          %1308 = vst [vmem:[#allocation2 + $0x34] sm:$0xf] %v1254
          %1309 = vst [vmem:[#allocation2 + $0x38] sm:$0x1] %v1255
          %1310 = vst [vmem:[#allocation2 + $0x3c] sm:$0xf] %v1256
          %1311 = vst [vmem:[#allocation2 + $0x40] sm:$0xf] %v1257
          %1312 = vst [vmem:[#allocation2 + $0x44] sm:$0x1] %v1258
          %1313 = vst [vmem:[#allocation2 + $0x48] sm:$0xf] %v1259
          %1314 = vst [vmem:[#allocation2 + $0x4c] sm:$0xf] %v1260
          %1315 = vst [vmem:[#allocation2 + $0x50] sm:$0x1] %v1261
          %1316 = vst [vmem:[#allocation2 + $0x54] sm:$0xf] %v1262
          %1317 = vst [vmem:[#allocation2 + $0x58] sm:$0xf] %v1263
          %1318 = vst [vmem:[#allocation2 + $0x5c] sm:$0x1] %v1264
          %1319 = vst [vmem:[#allocation2 + $0x60] sm:$0xf] %v1265
          %1320 = vst [vmem:[#allocation2 + $0x64] sm:$0xf] %v1266
          %1321 = vst [vmem:[#allocation2 + $0x68] sm:$0x1] %v1267
          %s1322 = scalar_lea.vmem [#allocation2], 108
          %1323 = vst [vmem:[%s1322] sm:$0xf] 0
          %1324 = vst [vmem:[%s1322 + $0x4] sm:$0xf] 0
          %1325 = vst [vmem:[%s1322 + $0x8] sm:$0x1] 0
        $region72: #{tpu_custom_call.1} parent=47 // pred_fallthru
          _
        %v1326 = vld [vmem:[#allocation8] sm:$0x3]
        %v1327 = vld [vmem:[#allocation8 + $0x2] sm:$0x3]
        %v1328 = vld [vmem:[#allocation8 + $0x4] sm:$0x3]
        %v1329 = vld [vmem:[#allocation2] sm:$0xf]
        %v1330 = vld [vmem:[#allocation2 + $0x4] sm:$0xf]
        %v1331 = vld [vmem:[#allocation2 + $0xc] sm:$0xf]
        %v1332 = vld [vmem:[#allocation2 + $0x10] sm:$0xf]
        %v1333 = vld [vmem:[#allocation2 + $0x18] sm:$0xf]
        %v1334 = vld [vmem:[#allocation2 + $0x1c] sm:$0xf]
        %v1335 = vld [vmem:[#allocation2 + $0x24] sm:$0xf]
        %v1336 = vld [vmem:[#allocation2 + $0x28] sm:$0xf]
        %v1337 = vld [vmem:[#allocation2 + $0x30] sm:$0xf]
        %v1338 = vld [vmem:[#allocation2 + $0x34] sm:$0xf]
        %v1339 = vld [vmem:[#allocation2 + $0x3c] sm:$0xf]
        %v1340 = vld [vmem:[#allocation2 + $0x40] sm:$0xf]
        %v1341 = vld [vmem:[#allocation2 + $0x48] sm:$0xf]
        %v1342 = vld [vmem:[#allocation2 + $0x4c] sm:$0xf]
        %v1343 = vld [vmem:[#allocation2 + $0x54] sm:$0xf]
        %v1344 = vld [vmem:[#allocation2 + $0x58] sm:$0xf]
        %v1346 = vpack.i.b16 %v1326, %v1326
        %v1348 = vlaneseq
        %v1349 = vshrl.u32 %v1348, 7
        %v1350 = vsub.s32 0, %v1349
        %v1351 = vrot.slane %v1346, %v1350
        %v1353 = vunpack.c.l.b16 %v1351
        %v1354 = vpack.c.b16 %v1353, %v1353
        %v1356 = vmul.bf16 %v1329, %v1354
        %v1357 = vmul.bf16 %v1330, %v1354
        %v1358 = vmul.bf16 %v1331, %v1354
        %v1359 = vmul.bf16 %v1332, %v1354
        %v1360 = vmul.bf16 %v1333, %v1354
        %v1361 = vmul.bf16 %v1334, %v1354
        %v1362 = vmul.bf16 %v1335, %v1354
        %v1363 = vmul.bf16 %v1336, %v1354
        %v1364 = vmul.bf16 %v1337, %v1354
        %v1365 = vmul.bf16 %v1338, %v1354
        %v1366 = vmul.bf16 %v1339, %v1354
        %v1367 = vmul.bf16 %v1340, %v1354
        %v1368 = vmul.bf16 %v1341, %v1354
        %v1369 = vmul.bf16 %v1342, %v1354
        %v1370 = vmul.bf16 %v1343, %v1354
        %v1371 = vmul.bf16 %v1344, %v1354
        %v1372 = vld [vmem:[#allocation2 + $0x8] sm:$0x1]
        %v1373 = vld [vmem:[#allocation2 + $0x14] sm:$0x1]
        %v1374 = vld [vmem:[#allocation2 + $0x20] sm:$0x1]
        %v1375 = vld [vmem:[#allocation2 + $0x2c] sm:$0x1]
        %v1376 = vld [vmem:[#allocation2 + $0x38] sm:$0x1]
        %v1377 = vld [vmem:[#allocation2 + $0x44] sm:$0x1]
        %v1378 = vld [vmem:[#allocation2 + $0x50] sm:$0x1]
        %v1379 = vld [vmem:[#allocation2 + $0x5c] sm:$0x1]
        %v1380 = vshrl.u32 %v1326, 16
        %v1381 = vpack.i.b16 %v1380, %v1380
        %v1383 = vlaneseq
        %v1384 = vshrl.u32 %v1383, 7
        %v1385 = vsub.s32 0, %v1384
        %v1386 = vrot.slane %v1381, %v1385
        %v1388 = vunpack.c.l.b16 %v1386
        %v1389 = vpack.c.b16 %v1388, %v1388
        %v1391 = vmul.bf16 %v1329, %v1389
        %v1392 = vmul.bf16 %v1330, %v1389
        %v1393 = vmul.bf16 %v1372, %v1389
        %v1394 = vmul.bf16 %v1331, %v1389
        %v1395 = vmul.bf16 %v1332, %v1389
        %v1396 = vmul.bf16 %v1373, %v1389
        %v1397 = vmul.bf16 %v1333, %v1389
        %v1398 = vmul.bf16 %v1334, %v1389
        %v1399 = vmul.bf16 %v1374, %v1389
        %v1400 = vmul.bf16 %v1335, %v1389
        %v1401 = vmul.bf16 %v1336, %v1389
        %v1402 = vmul.bf16 %v1375, %v1389
        %v1403 = vmul.bf16 %v1337, %v1389
        %v1404 = vmul.bf16 %v1338, %v1389
        %v1405 = vmul.bf16 %v1376, %v1389
        %v1406 = vmul.bf16 %v1339, %v1389
        %v1407 = vmul.bf16 %v1340, %v1389
        %v1408 = vmul.bf16 %v1377, %v1389
        %v1409 = vmul.bf16 %v1341, %v1389
        %v1410 = vmul.bf16 %v1342, %v1389
        %v1411 = vmul.bf16 %v1378, %v1389
        %v1412 = vmul.bf16 %v1343, %v1389
        %v1413 = vmul.bf16 %v1344, %v1389
        %v1414 = vmul.bf16 %v1379, %v1389
        %vm1415 = vsmask.f32 3328
        %vm1416 = vsmask.f32 7440
        %vm1417 = vmor %vm1415, %vm1416
        %v1419 = vshrl.u32 %v1391, 16
        %v1421 = vrot.slane %v1419, 4
        %v1422 = vshll.u32 %v1391, 16
        %v1424 = vrot.slane %v1422, 5
        %v1425 = vor.u32 %v1421, %v1424
        %v1426 = vrot.slane %v1425, 4
        %v1428 = vshll.u32 %v1392, 16
        %v1430 = vrot.slane %v1428, 5
        %v1431 = vsel %vm1417, %v1426, %v1430
        %v1432 = vshrl.u32 %v1392, 16
        %v1434 = vrot.slane %v1432, 4
        %v1435 = vor.u32 %v1434, %v1430
        %v1436 = vrot.slane %v1435, 4
        %v1438 = vshll.u32 %v1393, 16
        %v1440 = vrot.slane %v1438, 5
        %v1441 = vsel %vm1417, %v1436, %v1440
        %v1443 = vshrl.u32 %v1394, 16
        %v1445 = vrot.slane %v1443, 4
        %v1446 = vshll.u32 %v1394, 16
        %v1448 = vrot.slane %v1446, 5
        %v1449 = vor.u32 %v1445, %v1448
        %v1450 = vrot.slane %v1449, 4
        %v1452 = vshll.u32 %v1395, 16
        %v1454 = vrot.slane %v1452, 5
        %v1455 = vsel %vm1417, %v1450, %v1454
        %v1456 = vshrl.u32 %v1395, 16
        %v1458 = vrot.slane %v1456, 4
        %v1459 = vor.u32 %v1458, %v1454
        %v1460 = vrot.slane %v1459, 4
        %v1462 = vshll.u32 %v1396, 16
        %v1464 = vrot.slane %v1462, 5
        %v1465 = vsel %vm1417, %v1460, %v1464
        %v1467 = vshrl.u32 %v1397, 16
        %v1469 = vrot.slane %v1467, 4
        %v1470 = vshll.u32 %v1397, 16
        %v1472 = vrot.slane %v1470, 5
        %v1473 = vor.u32 %v1469, %v1472
        %v1474 = vrot.slane %v1473, 4
        %v1476 = vshll.u32 %v1398, 16
        %v1478 = vrot.slane %v1476, 5
        %v1479 = vsel %vm1417, %v1474, %v1478
        %v1480 = vshrl.u32 %v1398, 16
        %v1482 = vrot.slane %v1480, 4
        %v1483 = vor.u32 %v1482, %v1478
        %v1484 = vrot.slane %v1483, 4
        %v1486 = vshll.u32 %v1399, 16
        %v1488 = vrot.slane %v1486, 5
        %v1489 = vsel %vm1417, %v1484, %v1488
        %v1491 = vshrl.u32 %v1400, 16
        %v1493 = vrot.slane %v1491, 4
        %v1494 = vshll.u32 %v1400, 16
        %v1496 = vrot.slane %v1494, 5
        %v1497 = vor.u32 %v1493, %v1496
        %v1498 = vrot.slane %v1497, 4
        %v1500 = vshll.u32 %v1401, 16
        %v1502 = vrot.slane %v1500, 5
        %v1503 = vsel %vm1417, %v1498, %v1502
        %v1504 = vshrl.u32 %v1401, 16
        %v1506 = vrot.slane %v1504, 4
        %v1507 = vor.u32 %v1506, %v1502
        %v1508 = vrot.slane %v1507, 4
        %v1510 = vshll.u32 %v1402, 16
        %v1512 = vrot.slane %v1510, 5
        %v1513 = vsel %vm1417, %v1508, %v1512
        %v1515 = vshrl.u32 %v1403, 16
        %v1517 = vrot.slane %v1515, 4
        %v1518 = vshll.u32 %v1403, 16
        %v1520 = vrot.slane %v1518, 5
        %v1521 = vor.u32 %v1517, %v1520
        %v1522 = vrot.slane %v1521, 4
        %v1524 = vshll.u32 %v1404, 16
        %v1526 = vrot.slane %v1524, 5
        %v1527 = vsel %vm1417, %v1522, %v1526
        %v1528 = vshrl.u32 %v1404, 16
        %v1530 = vrot.slane %v1528, 4
        %v1531 = vor.u32 %v1530, %v1526
        %v1532 = vrot.slane %v1531, 4
        %v1534 = vshll.u32 %v1405, 16
        %v1536 = vrot.slane %v1534, 5
        %v1537 = vsel %vm1417, %v1532, %v1536
        %v1539 = vshrl.u32 %v1406, 16
        %v1541 = vrot.slane %v1539, 4
        %v1542 = vshll.u32 %v1406, 16
        %v1544 = vrot.slane %v1542, 5
        %v1545 = vor.u32 %v1541, %v1544
        %v1546 = vrot.slane %v1545, 4
        %v1548 = vshll.u32 %v1407, 16
        %v1550 = vrot.slane %v1548, 5
        %v1551 = vsel %vm1417, %v1546, %v1550
        %v1552 = vshrl.u32 %v1407, 16
        %v1554 = vrot.slane %v1552, 4
        %v1555 = vor.u32 %v1554, %v1550
        %v1556 = vrot.slane %v1555, 4
        %v1558 = vshll.u32 %v1408, 16
        %v1560 = vrot.slane %v1558, 5
        %v1561 = vsel %vm1417, %v1556, %v1560
        %v1563 = vshrl.u32 %v1409, 16
        %v1565 = vrot.slane %v1563, 4
        %v1566 = vshll.u32 %v1409, 16
        %v1568 = vrot.slane %v1566, 5
        %v1569 = vor.u32 %v1565, %v1568
        %v1570 = vrot.slane %v1569, 4
        %v1572 = vshll.u32 %v1410, 16
        %v1574 = vrot.slane %v1572, 5
        %v1575 = vsel %vm1417, %v1570, %v1574
        %v1576 = vshrl.u32 %v1410, 16
        %v1578 = vrot.slane %v1576, 4
        %v1579 = vor.u32 %v1578, %v1574
        %v1580 = vrot.slane %v1579, 4
        %v1582 = vshll.u32 %v1411, 16
        %v1584 = vrot.slane %v1582, 5
        %v1585 = vsel %vm1417, %v1580, %v1584
        %v1587 = vshrl.u32 %v1412, 16
        %v1589 = vrot.slane %v1587, 4
        %v1590 = vshll.u32 %v1412, 16
        %v1592 = vrot.slane %v1590, 5
        %v1593 = vor.u32 %v1589, %v1592
        %v1594 = vrot.slane %v1593, 4
        %v1596 = vshll.u32 %v1413, 16
        %v1598 = vrot.slane %v1596, 5
        %v1599 = vsel %vm1417, %v1594, %v1598
        %v1600 = vshrl.u32 %v1413, 16
        %v1602 = vrot.slane %v1600, 4
        %v1603 = vor.u32 %v1602, %v1598
        %v1604 = vrot.slane %v1603, 4
        %v1606 = vshll.u32 %v1414, 16
        %v1608 = vrot.slane %v1606, 5
        %v1609 = vsel %vm1417, %v1604, %v1608
        %v1626 = vadd.bf16 %v1356, %v1431
        %v1627 = vadd.bf16 %v1357, %v1441
        %v1628 = vadd.bf16 %v1358, %v1455
        %v1629 = vadd.bf16 %v1359, %v1465
        %v1630 = vadd.bf16 %v1360, %v1479
        %v1631 = vadd.bf16 %v1361, %v1489
        %v1632 = vadd.bf16 %v1362, %v1503
        %v1633 = vadd.bf16 %v1363, %v1513
        %v1634 = vadd.bf16 %v1364, %v1527
        %v1635 = vadd.bf16 %v1365, %v1537
        %v1636 = vadd.bf16 %v1366, %v1551
        %v1637 = vadd.bf16 %v1367, %v1561
        %v1638 = vadd.bf16 %v1368, %v1575
        %v1639 = vadd.bf16 %v1369, %v1585
        %v1640 = vadd.bf16 %v1370, %v1599
        %v1641 = vadd.bf16 %v1371, %v1609
        %v1642 = vld [vmem:[#allocation2] sm:$0xe]
        %v1643 = vld [vmem:[#allocation2 + $0xc] sm:$0xe]
        %v1644 = vld [vmem:[#allocation2 + $0x18] sm:$0xe]
        %v1645 = vld [vmem:[#allocation2 + $0x24] sm:$0xe]
        %v1646 = vld [vmem:[#allocation2 + $0x30] sm:$0xe]
        %v1647 = vld [vmem:[#allocation2 + $0x3c] sm:$0xe]
        %v1648 = vld [vmem:[#allocation2 + $0x48] sm:$0xe]
        %v1649 = vld [vmem:[#allocation2 + $0x54] sm:$0xe]
        %v1650 = vlaneseq
        %v1651 = vshrl.u32 %v1650, 7
        %v1652 = vsub.s32 1, %v1651
        %v1653 = vrot.slane %v1346, %v1652
        %v1655 = vunpack.c.l.b16 %v1653
        %v1656 = vpack.c.b16 %v1655, %v1655
        %v1658 = vmul.bf16 %v1642, %v1656
        %v1659 = vmul.bf16 %v1330, %v1656
        %v1660 = vmul.bf16 %v1372, %v1656
        %v1661 = vmul.bf16 %v1643, %v1656
        %v1662 = vmul.bf16 %v1332, %v1656
        %v1663 = vmul.bf16 %v1373, %v1656
        %v1664 = vmul.bf16 %v1644, %v1656
        %v1665 = vmul.bf16 %v1334, %v1656
        %v1666 = vmul.bf16 %v1374, %v1656
        %v1667 = vmul.bf16 %v1645, %v1656
        %v1668 = vmul.bf16 %v1336, %v1656
        %v1669 = vmul.bf16 %v1375, %v1656
        %v1670 = vmul.bf16 %v1646, %v1656
        %v1671 = vmul.bf16 %v1338, %v1656
        %v1672 = vmul.bf16 %v1376, %v1656
        %v1673 = vmul.bf16 %v1647, %v1656
        %v1674 = vmul.bf16 %v1340, %v1656
        %v1675 = vmul.bf16 %v1377, %v1656
        %v1676 = vmul.bf16 %v1648, %v1656
        %v1677 = vmul.bf16 %v1342, %v1656
        %v1678 = vmul.bf16 %v1378, %v1656
        %v1679 = vmul.bf16 %v1649, %v1656
        %v1680 = vmul.bf16 %v1344, %v1656
        %v1681 = vmul.bf16 %v1379, %v1656
        %vm1706 = vcmask 1042432
        %vm1707 = vcmask 1046532
        %vm1708 = vmor %vm1706, %vm1707
        %v1709 = vrot.slane %v1658, 5
        %v1710 = vrot.slane %v1709, 4
        %v1711 = vrot.slane %v1659, 5
        %v1712 = vsel %vm1708, %v1710, %v1711
        %v1713 = vrot.slane %v1711, 4
        %v1714 = vrot.slane %v1660, 5
        %v1715 = vsel %vm1708, %v1713, %v1714
        %v1716 = vrot.slane %v1661, 5
        %v1717 = vrot.slane %v1716, 4
        %v1718 = vrot.slane %v1662, 5
        %v1719 = vsel %vm1708, %v1717, %v1718
        %v1720 = vrot.slane %v1718, 4
        %v1721 = vrot.slane %v1663, 5
        %v1722 = vsel %vm1708, %v1720, %v1721
        %v1723 = vrot.slane %v1664, 5
        %v1724 = vrot.slane %v1723, 4
        %v1725 = vrot.slane %v1665, 5
        %v1726 = vsel %vm1708, %v1724, %v1725
        %v1727 = vrot.slane %v1725, 4
        %v1728 = vrot.slane %v1666, 5
        %v1729 = vsel %vm1708, %v1727, %v1728
        %v1730 = vrot.slane %v1667, 5
        %v1731 = vrot.slane %v1730, 4
        %v1732 = vrot.slane %v1668, 5
        %v1733 = vsel %vm1708, %v1731, %v1732
        %v1734 = vrot.slane %v1732, 4
        %v1735 = vrot.slane %v1669, 5
        %v1736 = vsel %vm1708, %v1734, %v1735
        %v1737 = vrot.slane %v1670, 5
        %v1738 = vrot.slane %v1737, 4
        %v1739 = vrot.slane %v1671, 5
        %v1740 = vsel %vm1708, %v1738, %v1739
        %v1741 = vrot.slane %v1739, 4
        %v1742 = vrot.slane %v1672, 5
        %v1743 = vsel %vm1708, %v1741, %v1742
        %v1744 = vrot.slane %v1673, 5
        %v1745 = vrot.slane %v1744, 4
        %v1746 = vrot.slane %v1674, 5
        %v1747 = vsel %vm1708, %v1745, %v1746
        %v1748 = vrot.slane %v1746, 4
        %v1749 = vrot.slane %v1675, 5
        %v1750 = vsel %vm1708, %v1748, %v1749
        %v1751 = vrot.slane %v1676, 5
        %v1752 = vrot.slane %v1751, 4
        %v1753 = vrot.slane %v1677, 5
        %v1754 = vsel %vm1708, %v1752, %v1753
        %v1755 = vrot.slane %v1753, 4
        %v1756 = vrot.slane %v1678, 5
        %v1757 = vsel %vm1708, %v1755, %v1756
        %v1758 = vrot.slane %v1679, 5
        %v1759 = vrot.slane %v1758, 4
        %v1760 = vrot.slane %v1680, 5
        %v1761 = vsel %vm1708, %v1759, %v1760
        %v1762 = vrot.slane %v1760, 4
        %v1763 = vrot.slane %v1681, 5
        %v1764 = vsel %vm1708, %v1762, %v1763
        %v1781 = vadd.bf16 %v1626, %v1712
        %v1782 = vadd.bf16 %v1627, %v1715
        %v1783 = vadd.bf16 %v1628, %v1719
        %v1784 = vadd.bf16 %v1629, %v1722
        %v1785 = vadd.bf16 %v1630, %v1726
        %v1786 = vadd.bf16 %v1631, %v1729
        %v1787 = vadd.bf16 %v1632, %v1733
        %v1788 = vadd.bf16 %v1633, %v1736
        %v1789 = vadd.bf16 %v1634, %v1740
        %v1790 = vadd.bf16 %v1635, %v1743
        %v1791 = vadd.bf16 %v1636, %v1747
        %v1792 = vadd.bf16 %v1637, %v1750
        %v1793 = vadd.bf16 %v1638, %v1754
        %v1794 = vadd.bf16 %v1639, %v1757
        %v1795 = vadd.bf16 %v1640, %v1761
        %v1796 = vadd.bf16 %v1641, %v1764
        %s1797 = scalar_lea.vmem [#allocation2], 12
        %v1798 = vld [vmem:[%s1797] sm:$0xf]
        %v1799 = vld [vmem:[%s1797 + $0x4] sm:$0xf]
        %v1800 = vld [vmem:[%s1797 + $0xc] sm:$0xf]
        %v1801 = vld [vmem:[%s1797 + $0x10] sm:$0xf]
        %v1802 = vld [vmem:[%s1797 + $0x18] sm:$0xf]
        %v1803 = vld [vmem:[%s1797 + $0x1c] sm:$0xf]
        %v1804 = vld [vmem:[%s1797 + $0x24] sm:$0xf]
        %v1805 = vld [vmem:[%s1797 + $0x28] sm:$0xf]
        %v1806 = vld [vmem:[%s1797 + $0x30] sm:$0xf]
        %v1807 = vld [vmem:[%s1797 + $0x34] sm:$0xf]
        %v1808 = vld [vmem:[%s1797 + $0x3c] sm:$0xf]
        %v1809 = vld [vmem:[%s1797 + $0x40] sm:$0xf]
        %v1810 = vld [vmem:[%s1797 + $0x48] sm:$0xf]
        %v1811 = vld [vmem:[%s1797 + $0x4c] sm:$0xf]
        %v1812 = vld [vmem:[%s1797 + $0x54] sm:$0xf]
        %v1813 = vld [vmem:[%s1797 + $0x58] sm:$0xf]
        %v1815 = vpack.i.b16 %v1327, %v1327
        %v1817 = vlaneseq
        %v1818 = vshrl.u32 %v1817, 7
        %v1819 = vsub.s32 0, %v1818
        %v1820 = vrot.slane %v1815, %v1819
        %v1822 = vunpack.c.l.b16 %v1820
        %v1823 = vpack.c.b16 %v1822, %v1822
        %v1825 = vmul.bf16 %v1798, %v1823
        %v1826 = vmul.bf16 %v1799, %v1823
        %v1827 = vmul.bf16 %v1800, %v1823
        %v1828 = vmul.bf16 %v1801, %v1823
        %v1829 = vmul.bf16 %v1802, %v1823
        %v1830 = vmul.bf16 %v1803, %v1823
        %v1831 = vmul.bf16 %v1804, %v1823
        %v1832 = vmul.bf16 %v1805, %v1823
        %v1833 = vmul.bf16 %v1806, %v1823
        %v1834 = vmul.bf16 %v1807, %v1823
        %v1835 = vmul.bf16 %v1808, %v1823
        %v1836 = vmul.bf16 %v1809, %v1823
        %v1837 = vmul.bf16 %v1810, %v1823
        %v1838 = vmul.bf16 %v1811, %v1823
        %v1839 = vmul.bf16 %v1812, %v1823
        %v1840 = vmul.bf16 %v1813, %v1823
        %v1841 = vadd.bf16 %v1781, %v1825
        %v1842 = vadd.bf16 %v1782, %v1826
        %v1843 = vadd.bf16 %v1783, %v1827
        %v1844 = vadd.bf16 %v1784, %v1828
        %v1845 = vadd.bf16 %v1785, %v1829
        %v1846 = vadd.bf16 %v1786, %v1830
        %v1847 = vadd.bf16 %v1787, %v1831
        %v1848 = vadd.bf16 %v1788, %v1832
        %v1849 = vadd.bf16 %v1789, %v1833
        %v1850 = vadd.bf16 %v1790, %v1834
        %v1851 = vadd.bf16 %v1791, %v1835
        %v1852 = vadd.bf16 %v1792, %v1836
        %v1853 = vadd.bf16 %v1793, %v1837
        %v1854 = vadd.bf16 %v1794, %v1838
        %v1855 = vadd.bf16 %v1795, %v1839
        %v1856 = vadd.bf16 %v1796, %v1840
        %v1857 = vld [vmem:[%s1797 + $0x8] sm:$0x1]
        %v1858 = vld [vmem:[%s1797 + $0x14] sm:$0x1]
        %v1859 = vld [vmem:[%s1797 + $0x20] sm:$0x1]
        %v1860 = vld [vmem:[%s1797 + $0x2c] sm:$0x1]
        %v1861 = vld [vmem:[%s1797 + $0x38] sm:$0x1]
        %v1862 = vld [vmem:[%s1797 + $0x44] sm:$0x1]
        %v1863 = vld [vmem:[%s1797 + $0x50] sm:$0x1]
        %v1864 = vld [vmem:[%s1797 + $0x5c] sm:$0x1]
        %v1865 = vshrl.u32 %v1327, 16
        %v1866 = vpack.i.b16 %v1865, %v1865
        %v1868 = vlaneseq
        %v1869 = vshrl.u32 %v1868, 7
        %v1870 = vsub.s32 0, %v1869
        %v1871 = vrot.slane %v1866, %v1870
        %v1873 = vunpack.c.l.b16 %v1871
        %v1874 = vpack.c.b16 %v1873, %v1873
        %v1876 = vmul.bf16 %v1798, %v1874
        %v1877 = vmul.bf16 %v1799, %v1874
        %v1878 = vmul.bf16 %v1857, %v1874
        %v1879 = vmul.bf16 %v1800, %v1874
        %v1880 = vmul.bf16 %v1801, %v1874
        %v1881 = vmul.bf16 %v1858, %v1874
        %v1882 = vmul.bf16 %v1802, %v1874
        %v1883 = vmul.bf16 %v1803, %v1874
        %v1884 = vmul.bf16 %v1859, %v1874
        %v1885 = vmul.bf16 %v1804, %v1874
        %v1886 = vmul.bf16 %v1805, %v1874
        %v1887 = vmul.bf16 %v1860, %v1874
        %v1888 = vmul.bf16 %v1806, %v1874
        %v1889 = vmul.bf16 %v1807, %v1874
        %v1890 = vmul.bf16 %v1861, %v1874
        %v1891 = vmul.bf16 %v1808, %v1874
        %v1892 = vmul.bf16 %v1809, %v1874
        %v1893 = vmul.bf16 %v1862, %v1874
        %v1894 = vmul.bf16 %v1810, %v1874
        %v1895 = vmul.bf16 %v1811, %v1874
        %v1896 = vmul.bf16 %v1863, %v1874
        %v1897 = vmul.bf16 %v1812, %v1874
        %v1898 = vmul.bf16 %v1813, %v1874
        %v1899 = vmul.bf16 %v1864, %v1874
        %v1901 = vshrl.u32 %v1876, 16
        %v1903 = vrot.slane %v1901, 4
        %v1904 = vshll.u32 %v1876, 16
        %v1906 = vrot.slane %v1904, 5
        %v1907 = vor.u32 %v1903, %v1906
        %v1908 = vrot.slane %v1907, 4
        %v1910 = vshll.u32 %v1877, 16
        %v1912 = vrot.slane %v1910, 5
        %v1913 = vsel %vm1417, %v1908, %v1912
        %v1914 = vshrl.u32 %v1877, 16
        %v1916 = vrot.slane %v1914, 4
        %v1917 = vor.u32 %v1916, %v1912
        %v1918 = vrot.slane %v1917, 4
        %v1920 = vshll.u32 %v1878, 16
        %v1922 = vrot.slane %v1920, 5
        %v1923 = vsel %vm1417, %v1918, %v1922
        %v1925 = vshrl.u32 %v1879, 16
        %v1927 = vrot.slane %v1925, 4
        %v1928 = vshll.u32 %v1879, 16
        %v1930 = vrot.slane %v1928, 5
        %v1931 = vor.u32 %v1927, %v1930
        %v1932 = vrot.slane %v1931, 4
        %v1934 = vshll.u32 %v1880, 16
        %v1936 = vrot.slane %v1934, 5
        %v1937 = vsel %vm1417, %v1932, %v1936
        %v1938 = vshrl.u32 %v1880, 16
        %v1940 = vrot.slane %v1938, 4
        %v1941 = vor.u32 %v1940, %v1936
        %v1942 = vrot.slane %v1941, 4
        %v1944 = vshll.u32 %v1881, 16
        %v1946 = vrot.slane %v1944, 5
        %v1947 = vsel %vm1417, %v1942, %v1946
        %v1949 = vshrl.u32 %v1882, 16
        %v1951 = vrot.slane %v1949, 4
        %v1952 = vshll.u32 %v1882, 16
        %v1954 = vrot.slane %v1952, 5
        %v1955 = vor.u32 %v1951, %v1954
        %v1956 = vrot.slane %v1955, 4
        %v1958 = vshll.u32 %v1883, 16
        %v1960 = vrot.slane %v1958, 5
        %v1961 = vsel %vm1417, %v1956, %v1960
        %v1962 = vshrl.u32 %v1883, 16
        %v1964 = vrot.slane %v1962, 4
        %v1965 = vor.u32 %v1964, %v1960
        %v1966 = vrot.slane %v1965, 4
        %v1968 = vshll.u32 %v1884, 16
        %v1970 = vrot.slane %v1968, 5
        %v1971 = vsel %vm1417, %v1966, %v1970
        %v1973 = vshrl.u32 %v1885, 16
        %v1975 = vrot.slane %v1973, 4
        %v1976 = vshll.u32 %v1885, 16
        %v1978 = vrot.slane %v1976, 5
        %v1979 = vor.u32 %v1975, %v1978
        %v1980 = vrot.slane %v1979, 4
        %v1982 = vshll.u32 %v1886, 16
        %v1984 = vrot.slane %v1982, 5
        %v1985 = vsel %vm1417, %v1980, %v1984
        %v1986 = vshrl.u32 %v1886, 16
        %v1988 = vrot.slane %v1986, 4
        %v1989 = vor.u32 %v1988, %v1984
        %v1990 = vrot.slane %v1989, 4
        %v1992 = vshll.u32 %v1887, 16
        %v1994 = vrot.slane %v1992, 5
        %v1995 = vsel %vm1417, %v1990, %v1994
        %v1997 = vshrl.u32 %v1888, 16
        %v1999 = vrot.slane %v1997, 4
        %v2000 = vshll.u32 %v1888, 16
        %v2002 = vrot.slane %v2000, 5
        %v2003 = vor.u32 %v1999, %v2002
        %v2004 = vrot.slane %v2003, 4
        %v2006 = vshll.u32 %v1889, 16
        %v2008 = vrot.slane %v2006, 5
        %v2009 = vsel %vm1417, %v2004, %v2008
        %v2010 = vshrl.u32 %v1889, 16
        %v2012 = vrot.slane %v2010, 4
        %v2013 = vor.u32 %v2012, %v2008
        %v2014 = vrot.slane %v2013, 4
        %v2016 = vshll.u32 %v1890, 16
        %v2018 = vrot.slane %v2016, 5
        %v2019 = vsel %vm1417, %v2014, %v2018
        %v2021 = vshrl.u32 %v1891, 16
        %v2023 = vrot.slane %v2021, 4
        %v2024 = vshll.u32 %v1891, 16
        %v2026 = vrot.slane %v2024, 5
        %v2027 = vor.u32 %v2023, %v2026
        %v2028 = vrot.slane %v2027, 4
        %v2030 = vshll.u32 %v1892, 16
        %v2032 = vrot.slane %v2030, 5
        %v2033 = vsel %vm1417, %v2028, %v2032
        %v2034 = vshrl.u32 %v1892, 16
        %v2036 = vrot.slane %v2034, 4
        %v2037 = vor.u32 %v2036, %v2032
        %v2038 = vrot.slane %v2037, 4
        %v2040 = vshll.u32 %v1893, 16
        %v2042 = vrot.slane %v2040, 5
        %v2043 = vsel %vm1417, %v2038, %v2042
        %v2045 = vshrl.u32 %v1894, 16
        %v2047 = vrot.slane %v2045, 4
        %v2048 = vshll.u32 %v1894, 16
        %v2050 = vrot.slane %v2048, 5
        %v2051 = vor.u32 %v2047, %v2050
        %v2052 = vrot.slane %v2051, 4
        %v2054 = vshll.u32 %v1895, 16
        %v2056 = vrot.slane %v2054, 5
        %v2057 = vsel %vm1417, %v2052, %v2056
        %v2058 = vshrl.u32 %v1895, 16
        %v2060 = vrot.slane %v2058, 4
        %v2061 = vor.u32 %v2060, %v2056
        %v2062 = vrot.slane %v2061, 4
        %v2064 = vshll.u32 %v1896, 16
        %v2066 = vrot.slane %v2064, 5
        %v2067 = vsel %vm1417, %v2062, %v2066
        %v2069 = vshrl.u32 %v1897, 16
        %v2071 = vrot.slane %v2069, 4
        %v2072 = vshll.u32 %v1897, 16
        %v2074 = vrot.slane %v2072, 5
        %v2075 = vor.u32 %v2071, %v2074
        %v2076 = vrot.slane %v2075, 4
        %v2078 = vshll.u32 %v1898, 16
        %v2080 = vrot.slane %v2078, 5
        %v2081 = vsel %vm1417, %v2076, %v2080
        %v2082 = vshrl.u32 %v1898, 16
        %v2084 = vrot.slane %v2082, 4
        %v2085 = vor.u32 %v2084, %v2080
        %v2086 = vrot.slane %v2085, 4
        %v2088 = vshll.u32 %v1899, 16
        %v2090 = vrot.slane %v2088, 5
        %v2091 = vsel %vm1417, %v2086, %v2090
        %v2108 = vadd.bf16 %v1841, %v1913
        %v2109 = vadd.bf16 %v1842, %v1923
        %v2110 = vadd.bf16 %v1843, %v1937
        %v2111 = vadd.bf16 %v1844, %v1947
        %v2112 = vadd.bf16 %v1845, %v1961
        %v2113 = vadd.bf16 %v1846, %v1971
        %v2114 = vadd.bf16 %v1847, %v1985
        %v2115 = vadd.bf16 %v1848, %v1995
        %v2116 = vadd.bf16 %v1849, %v2009
        %v2117 = vadd.bf16 %v1850, %v2019
        %v2118 = vadd.bf16 %v1851, %v2033
        %v2119 = vadd.bf16 %v1852, %v2043
        %v2120 = vadd.bf16 %v1853, %v2057
        %v2121 = vadd.bf16 %v1854, %v2067
        %v2122 = vadd.bf16 %v1855, %v2081
        %v2123 = vadd.bf16 %v1856, %v2091
        %v2124 = vld [vmem:[%s1797] sm:$0xe]
        %v2125 = vld [vmem:[%s1797 + $0xc] sm:$0xe]
        %v2126 = vld [vmem:[%s1797 + $0x18] sm:$0xe]
        %v2127 = vld [vmem:[%s1797 + $0x24] sm:$0xe]
        %v2128 = vld [vmem:[%s1797 + $0x30] sm:$0xe]
        %v2129 = vld [vmem:[%s1797 + $0x3c] sm:$0xe]
        %v2130 = vld [vmem:[%s1797 + $0x48] sm:$0xe]
        %v2131 = vld [vmem:[%s1797 + $0x54] sm:$0xe]
        %v2132 = vlaneseq
        %v2133 = vshrl.u32 %v2132, 7
        %v2134 = vsub.s32 1, %v2133
        %v2135 = vrot.slane %v1815, %v2134
        %v2137 = vunpack.c.l.b16 %v2135
        %v2138 = vpack.c.b16 %v2137, %v2137
        %v2140 = vmul.bf16 %v2124, %v2138
        %v2141 = vmul.bf16 %v1799, %v2138
        %v2142 = vmul.bf16 %v1857, %v2138
        %v2143 = vmul.bf16 %v2125, %v2138
        %v2144 = vmul.bf16 %v1801, %v2138
        %v2145 = vmul.bf16 %v1858, %v2138
        %v2146 = vmul.bf16 %v2126, %v2138
        %v2147 = vmul.bf16 %v1803, %v2138
        %v2148 = vmul.bf16 %v1859, %v2138
        %v2149 = vmul.bf16 %v2127, %v2138
        %v2150 = vmul.bf16 %v1805, %v2138
        %v2151 = vmul.bf16 %v1860, %v2138
        %v2152 = vmul.bf16 %v2128, %v2138
        %v2153 = vmul.bf16 %v1807, %v2138
        %v2154 = vmul.bf16 %v1861, %v2138
        %v2155 = vmul.bf16 %v2129, %v2138
        %v2156 = vmul.bf16 %v1809, %v2138
        %v2157 = vmul.bf16 %v1862, %v2138
        %v2158 = vmul.bf16 %v2130, %v2138
        %v2159 = vmul.bf16 %v1811, %v2138
        %v2160 = vmul.bf16 %v1863, %v2138
        %v2161 = vmul.bf16 %v2131, %v2138
        %v2162 = vmul.bf16 %v1813, %v2138
        %v2163 = vmul.bf16 %v1864, %v2138
        %v2188 = vrot.slane %v2140, 5
        %v2189 = vrot.slane %v2188, 4
        %v2190 = vrot.slane %v2141, 5
        %v2191 = vsel %vm1708, %v2189, %v2190
        %v2192 = vrot.slane %v2190, 4
        %v2193 = vrot.slane %v2142, 5
        %v2194 = vsel %vm1708, %v2192, %v2193
        %v2195 = vrot.slane %v2143, 5
        %v2196 = vrot.slane %v2195, 4
        %v2197 = vrot.slane %v2144, 5
        %v2198 = vsel %vm1708, %v2196, %v2197
        %v2199 = vrot.slane %v2197, 4
        %v2200 = vrot.slane %v2145, 5
        %v2201 = vsel %vm1708, %v2199, %v2200
        %v2202 = vrot.slane %v2146, 5
        %v2203 = vrot.slane %v2202, 4
        %v2204 = vrot.slane %v2147, 5
        %v2205 = vsel %vm1708, %v2203, %v2204
        %v2206 = vrot.slane %v2204, 4
        %v2207 = vrot.slane %v2148, 5
        %v2208 = vsel %vm1708, %v2206, %v2207
        %v2209 = vrot.slane %v2149, 5
        %v2210 = vrot.slane %v2209, 4
        %v2211 = vrot.slane %v2150, 5
        %v2212 = vsel %vm1708, %v2210, %v2211
        %v2213 = vrot.slane %v2211, 4
        %v2214 = vrot.slane %v2151, 5
        %v2215 = vsel %vm1708, %v2213, %v2214
        %v2216 = vrot.slane %v2152, 5
        %v2217 = vrot.slane %v2216, 4
        %v2218 = vrot.slane %v2153, 5
        %v2219 = vsel %vm1708, %v2217, %v2218
        %v2220 = vrot.slane %v2218, 4
        %v2221 = vrot.slane %v2154, 5
        %v2222 = vsel %vm1708, %v2220, %v2221
        %v2223 = vrot.slane %v2155, 5
        %v2224 = vrot.slane %v2223, 4
        %v2225 = vrot.slane %v2156, 5
        %v2226 = vsel %vm1708, %v2224, %v2225
        %v2227 = vrot.slane %v2225, 4
        %v2228 = vrot.slane %v2157, 5
        %v2229 = vsel %vm1708, %v2227, %v2228
        %v2230 = vrot.slane %v2158, 5
        %v2231 = vrot.slane %v2230, 4
        %v2232 = vrot.slane %v2159, 5
        %v2233 = vsel %vm1708, %v2231, %v2232
        %v2234 = vrot.slane %v2232, 4
        %v2235 = vrot.slane %v2160, 5
        %v2236 = vsel %vm1708, %v2234, %v2235
        %v2237 = vrot.slane %v2161, 5
        %v2238 = vrot.slane %v2237, 4
        %v2239 = vrot.slane %v2162, 5
        %v2240 = vsel %vm1708, %v2238, %v2239
        %v2241 = vrot.slane %v2239, 4
        %v2242 = vrot.slane %v2163, 5
        %v2243 = vsel %vm1708, %v2241, %v2242
        %v2260 = vadd.bf16 %v2108, %v2191
        %v2261 = vadd.bf16 %v2109, %v2194
        %v2262 = vadd.bf16 %v2110, %v2198
        %v2263 = vadd.bf16 %v2111, %v2201
        %v2264 = vadd.bf16 %v2112, %v2205
        %v2265 = vadd.bf16 %v2113, %v2208
        %v2266 = vadd.bf16 %v2114, %v2212
        %v2267 = vadd.bf16 %v2115, %v2215
        %v2268 = vadd.bf16 %v2116, %v2219
        %v2269 = vadd.bf16 %v2117, %v2222
        %v2270 = vadd.bf16 %v2118, %v2226
        %v2271 = vadd.bf16 %v2119, %v2229
        %v2272 = vadd.bf16 %v2120, %v2233
        %v2273 = vadd.bf16 %v2121, %v2236
        %v2274 = vadd.bf16 %v2122, %v2240
        %v2275 = vadd.bf16 %v2123, %v2243
        %s2276 = scalar_lea.vmem [#allocation2], 24
        %v2277 = vld [vmem:[%s2276] sm:$0xf]
        %v2278 = vld [vmem:[%s2276 + $0x4] sm:$0xf]
        %v2279 = vld [vmem:[%s2276 + $0xc] sm:$0xf]
        %v2280 = vld [vmem:[%s2276 + $0x10] sm:$0xf]
        %v2281 = vld [vmem:[%s2276 + $0x18] sm:$0xf]
        %v2282 = vld [vmem:[%s2276 + $0x1c] sm:$0xf]
        %v2283 = vld [vmem:[%s2276 + $0x24] sm:$0xf]
        %v2284 = vld [vmem:[%s2276 + $0x28] sm:$0xf]
        %v2285 = vld [vmem:[%s2276 + $0x30] sm:$0xf]
        %v2286 = vld [vmem:[%s2276 + $0x34] sm:$0xf]
        %v2287 = vld [vmem:[%s2276 + $0x3c] sm:$0xf]
        %v2288 = vld [vmem:[%s2276 + $0x40] sm:$0xf]
        %v2289 = vld [vmem:[%s2276 + $0x48] sm:$0xf]
        %v2290 = vld [vmem:[%s2276 + $0x4c] sm:$0xf]
        %v2291 = vld [vmem:[%s2276 + $0x54] sm:$0xf]
        %v2292 = vld [vmem:[%s2276 + $0x58] sm:$0xf]
        %v2294 = vpack.i.b16 %v1328, %v1328
        %v2296 = vlaneseq
        %v2297 = vshrl.u32 %v2296, 7
        %v2298 = vsub.s32 0, %v2297
        %v2299 = vrot.slane %v2294, %v2298
        %v2301 = vunpack.c.l.b16 %v2299
        %v2302 = vpack.c.b16 %v2301, %v2301
        %v2304 = vmul.bf16 %v2277, %v2302
        %v2305 = vmul.bf16 %v2278, %v2302
        %v2306 = vmul.bf16 %v2279, %v2302
        %v2307 = vmul.bf16 %v2280, %v2302
        %v2308 = vmul.bf16 %v2281, %v2302
        %v2309 = vmul.bf16 %v2282, %v2302
        %v2310 = vmul.bf16 %v2283, %v2302
        %v2311 = vmul.bf16 %v2284, %v2302
        %v2312 = vmul.bf16 %v2285, %v2302
        %v2313 = vmul.bf16 %v2286, %v2302
        %v2314 = vmul.bf16 %v2287, %v2302
        %v2315 = vmul.bf16 %v2288, %v2302
        %v2316 = vmul.bf16 %v2289, %v2302
        %v2317 = vmul.bf16 %v2290, %v2302
        %v2318 = vmul.bf16 %v2291, %v2302
        %v2319 = vmul.bf16 %v2292, %v2302
        %v2320 = vadd.bf16 %v2260, %v2304
        %v2321 = vadd.bf16 %v2261, %v2305
        %v2322 = vadd.bf16 %v2262, %v2306
        %v2323 = vadd.bf16 %v2263, %v2307
        %v2324 = vadd.bf16 %v2264, %v2308
        %v2325 = vadd.bf16 %v2265, %v2309
        %v2326 = vadd.bf16 %v2266, %v2310
        %v2327 = vadd.bf16 %v2267, %v2311
        %v2328 = vadd.bf16 %v2268, %v2312
        %v2329 = vadd.bf16 %v2269, %v2313
        %v2330 = vadd.bf16 %v2270, %v2314
        %v2331 = vadd.bf16 %v2271, %v2315
        %v2332 = vadd.bf16 %v2272, %v2316
        %v2333 = vadd.bf16 %v2273, %v2317
        %v2334 = vadd.bf16 %v2274, %v2318
        %v2335 = vadd.bf16 %v2275, %v2319
        %v2336 = vld [vmem:[%s2276 + $0x8] sm:$0x1]
        %v2337 = vld [vmem:[%s2276 + $0x14] sm:$0x1]
        %v2338 = vld [vmem:[%s2276 + $0x20] sm:$0x1]
        %v2339 = vld [vmem:[%s2276 + $0x2c] sm:$0x1]
        %v2340 = vld [vmem:[%s2276 + $0x38] sm:$0x1]
        %v2341 = vld [vmem:[%s2276 + $0x44] sm:$0x1]
        %v2342 = vld [vmem:[%s2276 + $0x50] sm:$0x1]
        %v2343 = vld [vmem:[%s2276 + $0x5c] sm:$0x1]
        %v2344 = vshrl.u32 %v1328, 16
        %v2345 = vpack.i.b16 %v2344, %v2344
        %v2347 = vlaneseq
        %v2348 = vshrl.u32 %v2347, 7
        %v2349 = vsub.s32 0, %v2348
        %v2350 = vrot.slane %v2345, %v2349
        %v2352 = vunpack.c.l.b16 %v2350
        %v2353 = vpack.c.b16 %v2352, %v2352
        %v2355 = vmul.bf16 %v2277, %v2353
        %v2356 = vmul.bf16 %v2278, %v2353
        %v2357 = vmul.bf16 %v2336, %v2353
        %v2358 = vmul.bf16 %v2279, %v2353
        %v2359 = vmul.bf16 %v2280, %v2353
        %v2360 = vmul.bf16 %v2337, %v2353
        %v2361 = vmul.bf16 %v2281, %v2353
        %v2362 = vmul.bf16 %v2282, %v2353
        %v2363 = vmul.bf16 %v2338, %v2353
        %v2364 = vmul.bf16 %v2283, %v2353
        %v2365 = vmul.bf16 %v2284, %v2353
        %v2366 = vmul.bf16 %v2339, %v2353
        %v2367 = vmul.bf16 %v2285, %v2353
        %v2368 = vmul.bf16 %v2286, %v2353
        %v2369 = vmul.bf16 %v2340, %v2353
        %v2370 = vmul.bf16 %v2287, %v2353
        %v2371 = vmul.bf16 %v2288, %v2353
        %v2372 = vmul.bf16 %v2341, %v2353
        %v2373 = vmul.bf16 %v2289, %v2353
        %v2374 = vmul.bf16 %v2290, %v2353
        %v2375 = vmul.bf16 %v2342, %v2353
        %v2376 = vmul.bf16 %v2291, %v2353
        %v2377 = vmul.bf16 %v2292, %v2353
        %v2378 = vmul.bf16 %v2343, %v2353
        %v2380 = vshrl.u32 %v2355, 16
        %v2382 = vrot.slane %v2380, 4
        %v2383 = vshll.u32 %v2355, 16
        %v2385 = vrot.slane %v2383, 5
        %v2386 = vor.u32 %v2382, %v2385
        %v2387 = vrot.slane %v2386, 4
        %v2389 = vshll.u32 %v2356, 16
        %v2391 = vrot.slane %v2389, 5
        %v2392 = vsel %vm1417, %v2387, %v2391
        %v2393 = vshrl.u32 %v2356, 16
        %v2395 = vrot.slane %v2393, 4
        %v2396 = vor.u32 %v2395, %v2391
        %v2397 = vrot.slane %v2396, 4
        %v2399 = vshll.u32 %v2357, 16
        %v2401 = vrot.slane %v2399, 5
        %v2402 = vsel %vm1417, %v2397, %v2401
        %v2404 = vshrl.u32 %v2358, 16
        %v2406 = vrot.slane %v2404, 4
        %v2407 = vshll.u32 %v2358, 16
        %v2409 = vrot.slane %v2407, 5
        %v2410 = vor.u32 %v2406, %v2409
        %v2411 = vrot.slane %v2410, 4
        %v2413 = vshll.u32 %v2359, 16
        %v2415 = vrot.slane %v2413, 5
        %v2416 = vsel %vm1417, %v2411, %v2415
        %v2417 = vshrl.u32 %v2359, 16
        %v2419 = vrot.slane %v2417, 4
        %v2420 = vor.u32 %v2419, %v2415
        %v2421 = vrot.slane %v2420, 4
        %v2423 = vshll.u32 %v2360, 16
        %v2425 = vrot.slane %v2423, 5
        %v2426 = vsel %vm1417, %v2421, %v2425
        %v2428 = vshrl.u32 %v2361, 16
        %v2430 = vrot.slane %v2428, 4
        %v2431 = vshll.u32 %v2361, 16
        %v2433 = vrot.slane %v2431, 5
        %v2434 = vor.u32 %v2430, %v2433
        %v2435 = vrot.slane %v2434, 4
        %v2437 = vshll.u32 %v2362, 16
        %v2439 = vrot.slane %v2437, 5
        %v2440 = vsel %vm1417, %v2435, %v2439
        %v2441 = vshrl.u32 %v2362, 16
        %v2443 = vrot.slane %v2441, 4
        %v2444 = vor.u32 %v2443, %v2439
        %v2445 = vrot.slane %v2444, 4
        %v2447 = vshll.u32 %v2363, 16
        %v2449 = vrot.slane %v2447, 5
        %v2450 = vsel %vm1417, %v2445, %v2449
        %v2452 = vshrl.u32 %v2364, 16
        %v2454 = vrot.slane %v2452, 4
        %v2455 = vshll.u32 %v2364, 16
        %v2457 = vrot.slane %v2455, 5
        %v2458 = vor.u32 %v2454, %v2457
        %v2459 = vrot.slane %v2458, 4
        %v2461 = vshll.u32 %v2365, 16
        %v2463 = vrot.slane %v2461, 5
        %v2464 = vsel %vm1417, %v2459, %v2463
        %v2465 = vshrl.u32 %v2365, 16
        %v2467 = vrot.slane %v2465, 4
        %v2468 = vor.u32 %v2467, %v2463
        %v2469 = vrot.slane %v2468, 4
        %v2471 = vshll.u32 %v2366, 16
        %v2473 = vrot.slane %v2471, 5
        %v2474 = vsel %vm1417, %v2469, %v2473
        %v2476 = vshrl.u32 %v2367, 16
        %v2478 = vrot.slane %v2476, 4
        %v2479 = vshll.u32 %v2367, 16
        %v2481 = vrot.slane %v2479, 5
        %v2482 = vor.u32 %v2478, %v2481
        %v2483 = vrot.slane %v2482, 4
        %v2485 = vshll.u32 %v2368, 16
        %v2487 = vrot.slane %v2485, 5
        %v2488 = vsel %vm1417, %v2483, %v2487
        %v2489 = vshrl.u32 %v2368, 16
        %v2491 = vrot.slane %v2489, 4
        %v2492 = vor.u32 %v2491, %v2487
        %v2493 = vrot.slane %v2492, 4
        %v2495 = vshll.u32 %v2369, 16
        %v2497 = vrot.slane %v2495, 5
        %v2498 = vsel %vm1417, %v2493, %v2497
        %v2500 = vshrl.u32 %v2370, 16
        %v2502 = vrot.slane %v2500, 4
        %v2503 = vshll.u32 %v2370, 16
        %v2505 = vrot.slane %v2503, 5
        %v2506 = vor.u32 %v2502, %v2505
        %v2507 = vrot.slane %v2506, 4
        %v2509 = vshll.u32 %v2371, 16
        %v2511 = vrot.slane %v2509, 5
        %v2512 = vsel %vm1417, %v2507, %v2511
        %v2513 = vshrl.u32 %v2371, 16
        %v2515 = vrot.slane %v2513, 4
        %v2516 = vor.u32 %v2515, %v2511
        %v2517 = vrot.slane %v2516, 4
        %v2519 = vshll.u32 %v2372, 16
        %v2521 = vrot.slane %v2519, 5
        %v2522 = vsel %vm1417, %v2517, %v2521
        %v2524 = vshrl.u32 %v2373, 16
        %v2526 = vrot.slane %v2524, 4
        %v2527 = vshll.u32 %v2373, 16
        %v2529 = vrot.slane %v2527, 5
        %v2530 = vor.u32 %v2526, %v2529
        %v2531 = vrot.slane %v2530, 4
        %v2533 = vshll.u32 %v2374, 16
        %v2535 = vrot.slane %v2533, 5
        %v2536 = vsel %vm1417, %v2531, %v2535
        %v2537 = vshrl.u32 %v2374, 16
        %v2539 = vrot.slane %v2537, 4
        %v2540 = vor.u32 %v2539, %v2535
        %v2541 = vrot.slane %v2540, 4
        %v2543 = vshll.u32 %v2375, 16
        %v2545 = vrot.slane %v2543, 5
        %v2546 = vsel %vm1417, %v2541, %v2545
        %v2548 = vshrl.u32 %v2376, 16
        %v2550 = vrot.slane %v2548, 4
        %v2551 = vshll.u32 %v2376, 16
        %v2553 = vrot.slane %v2551, 5
        %v2554 = vor.u32 %v2550, %v2553
        %v2555 = vrot.slane %v2554, 4
        %v2557 = vshll.u32 %v2377, 16
        %v2559 = vrot.slane %v2557, 5
        %v2560 = vsel %vm1417, %v2555, %v2559
        %v2561 = vshrl.u32 %v2377, 16
        %v2563 = vrot.slane %v2561, 4
        %v2564 = vor.u32 %v2563, %v2559
        %v2565 = vrot.slane %v2564, 4
        %v2567 = vshll.u32 %v2378, 16
        %v2569 = vrot.slane %v2567, 5
        %v2570 = vsel %vm1417, %v2565, %v2569
        %v2587 = vadd.bf16 %v2320, %v2392
        %v2588 = vadd.bf16 %v2321, %v2402
        %v2589 = vadd.bf16 %v2322, %v2416
        %v2590 = vadd.bf16 %v2323, %v2426
        %v2591 = vadd.bf16 %v2324, %v2440
        %v2592 = vadd.bf16 %v2325, %v2450
        %v2593 = vadd.bf16 %v2326, %v2464
        %v2594 = vadd.bf16 %v2327, %v2474
        %v2595 = vadd.bf16 %v2328, %v2488
        %v2596 = vadd.bf16 %v2329, %v2498
        %v2597 = vadd.bf16 %v2330, %v2512
        %v2598 = vadd.bf16 %v2331, %v2522
        %v2599 = vadd.bf16 %v2332, %v2536
        %v2600 = vadd.bf16 %v2333, %v2546
        %v2601 = vadd.bf16 %v2334, %v2560
        %v2602 = vadd.bf16 %v2335, %v2570
        %v2603 = vld [vmem:[%s2276] sm:$0xe]
        %v2604 = vld [vmem:[%s2276 + $0xc] sm:$0xe]
        %v2605 = vld [vmem:[%s2276 + $0x18] sm:$0xe]
        %v2606 = vld [vmem:[%s2276 + $0x24] sm:$0xe]
        %v2607 = vld [vmem:[%s2276 + $0x30] sm:$0xe]
        %v2608 = vld [vmem:[%s2276 + $0x3c] sm:$0xe]
        %v2609 = vld [vmem:[%s2276 + $0x48] sm:$0xe]
        %v2610 = vld [vmem:[%s2276 + $0x54] sm:$0xe]
        %v2611 = vlaneseq
        %v2612 = vshrl.u32 %v2611, 7
        %v2613 = vsub.s32 1, %v2612
        %v2614 = vrot.slane %v2294, %v2613
        %v2616 = vunpack.c.l.b16 %v2614
        %v2617 = vpack.c.b16 %v2616, %v2616
        %v2619 = vmul.bf16 %v2603, %v2617
        %v2620 = vmul.bf16 %v2278, %v2617
        %v2621 = vmul.bf16 %v2336, %v2617
        %v2622 = vmul.bf16 %v2604, %v2617
        %v2623 = vmul.bf16 %v2280, %v2617
        %v2624 = vmul.bf16 %v2337, %v2617
        %v2625 = vmul.bf16 %v2605, %v2617
        %v2626 = vmul.bf16 %v2282, %v2617
        %v2627 = vmul.bf16 %v2338, %v2617
        %v2628 = vmul.bf16 %v2606, %v2617
        %v2629 = vmul.bf16 %v2284, %v2617
        %v2630 = vmul.bf16 %v2339, %v2617
        %v2631 = vmul.bf16 %v2607, %v2617
        %v2632 = vmul.bf16 %v2286, %v2617
        %v2633 = vmul.bf16 %v2340, %v2617
        %v2634 = vmul.bf16 %v2608, %v2617
        %v2635 = vmul.bf16 %v2288, %v2617
        %v2636 = vmul.bf16 %v2341, %v2617
        %v2637 = vmul.bf16 %v2609, %v2617
        %v2638 = vmul.bf16 %v2290, %v2617
        %v2639 = vmul.bf16 %v2342, %v2617
        %v2640 = vmul.bf16 %v2610, %v2617
        %v2641 = vmul.bf16 %v2292, %v2617
        %v2642 = vmul.bf16 %v2343, %v2617
        %v2667 = vrot.slane %v2619, 5
        %v2668 = vrot.slane %v2667, 4
        %v2669 = vrot.slane %v2620, 5
        %v2670 = vsel %vm1708, %v2668, %v2669
        %v2671 = vrot.slane %v2669, 4
        %v2672 = vrot.slane %v2621, 5
        %v2673 = vsel %vm1708, %v2671, %v2672
        %v2674 = vrot.slane %v2622, 5
        %v2675 = vrot.slane %v2674, 4
        %v2676 = vrot.slane %v2623, 5
        %v2677 = vsel %vm1708, %v2675, %v2676
        %v2678 = vrot.slane %v2676, 4
        %v2679 = vrot.slane %v2624, 5
        %v2680 = vsel %vm1708, %v2678, %v2679
        %v2681 = vrot.slane %v2625, 5
        %v2682 = vrot.slane %v2681, 4
        %v2683 = vrot.slane %v2626, 5
        %v2684 = vsel %vm1708, %v2682, %v2683
        %v2685 = vrot.slane %v2683, 4
        %v2686 = vrot.slane %v2627, 5
        %v2687 = vsel %vm1708, %v2685, %v2686
        %v2688 = vrot.slane %v2628, 5
        %v2689 = vrot.slane %v2688, 4
        %v2690 = vrot.slane %v2629, 5
        %v2691 = vsel %vm1708, %v2689, %v2690
        %v2692 = vrot.slane %v2690, 4
        %v2693 = vrot.slane %v2630, 5
        %v2694 = vsel %vm1708, %v2692, %v2693
        %v2695 = vrot.slane %v2631, 5
        %v2696 = vrot.slane %v2695, 4
        %v2697 = vrot.slane %v2632, 5
        %v2698 = vsel %vm1708, %v2696, %v2697
        %v2699 = vrot.slane %v2697, 4
        %v2700 = vrot.slane %v2633, 5
        %v2701 = vsel %vm1708, %v2699, %v2700
        %v2702 = vrot.slane %v2634, 5
        %v2703 = vrot.slane %v2702, 4
        %v2704 = vrot.slane %v2635, 5
        %v2705 = vsel %vm1708, %v2703, %v2704
        %v2706 = vrot.slane %v2704, 4
        %v2707 = vrot.slane %v2636, 5
        %v2708 = vsel %vm1708, %v2706, %v2707
        %v2709 = vrot.slane %v2637, 5
        %v2710 = vrot.slane %v2709, 4
        %v2711 = vrot.slane %v2638, 5
        %v2712 = vsel %vm1708, %v2710, %v2711
        %v2713 = vrot.slane %v2711, 4
        %v2714 = vrot.slane %v2639, 5
        %v2715 = vsel %vm1708, %v2713, %v2714
        %v2716 = vrot.slane %v2640, 5
        %v2717 = vrot.slane %v2716, 4
        %v2718 = vrot.slane %v2641, 5
        %v2719 = vsel %vm1708, %v2717, %v2718
        %v2720 = vrot.slane %v2718, 4
        %v2721 = vrot.slane %v2642, 5
        %v2722 = vsel %vm1708, %v2720, %v2721
        %v2739 = vadd.bf16 %v2587, %v2670
        %v2740 = vadd.bf16 %v2588, %v2673
        %v2741 = vadd.bf16 %v2589, %v2677
        %v2742 = vadd.bf16 %v2590, %v2680
        %v2743 = vadd.bf16 %v2591, %v2684
        %v2744 = vadd.bf16 %v2592, %v2687
        %v2745 = vadd.bf16 %v2593, %v2691
        %v2746 = vadd.bf16 %v2594, %v2694
        %v2747 = vadd.bf16 %v2595, %v2698
        %v2748 = vadd.bf16 %v2596, %v2701
        %v2749 = vadd.bf16 %v2597, %v2705
        %v2750 = vadd.bf16 %v2598, %v2708
        %v2751 = vadd.bf16 %v2599, %v2712
        %v2752 = vadd.bf16 %v2600, %v2715
        %v2753 = vadd.bf16 %v2601, %v2719
        %v2754 = vadd.bf16 %v2602, %v2722
        %v2755 = vunpack.c.l.bf16 %v2739
        %v2756 = vunpack.c.l.bf16 %v2740
        %v2757 = vunpack.c.l.bf16 %v2741
        %v2758 = vunpack.c.l.bf16 %v2742
        %v2759 = vunpack.c.l.bf16 %v2743
        %v2760 = vunpack.c.l.bf16 %v2744
        %v2761 = vunpack.c.l.bf16 %v2745
        %v2762 = vunpack.c.l.bf16 %v2746
        %v2763 = vunpack.c.l.bf16 %v2747
        %v2764 = vunpack.c.l.bf16 %v2748
        %v2765 = vunpack.c.l.bf16 %v2749
        %v2766 = vunpack.c.l.bf16 %v2750
        %v2767 = vunpack.c.l.bf16 %v2751
        %v2768 = vunpack.c.l.bf16 %v2752
        %v2769 = vunpack.c.l.bf16 %v2753
        %v2770 = vunpack.c.l.bf16 %v2754
        %v2771 = vld [vmem:[%s4] sm:$0x1]
        %v2773 = vlaneseq
        %v2774 = vshrl.u32 %v2773, 7
        %v2775 = vsub.s32 0, %v2774
        %v2776 = vrot.slane %v2771, %v2775
        %v2778 = vadd.f32 %v2755, %v2776
        %v2779 = vadd.f32 %v2756, %v2776
        %v2780 = vadd.f32 %v2757, %v2776
        %v2781 = vadd.f32 %v2758, %v2776
        %v2782 = vadd.f32 %v2759, %v2776
        %v2783 = vadd.f32 %v2760, %v2776
        %v2784 = vadd.f32 %v2761, %v2776
        %v2785 = vadd.f32 %v2762, %v2776
        %v2786 = vadd.f32 %v2763, %v2776
        %v2787 = vadd.f32 %v2764, %v2776
        %v2788 = vadd.f32 %v2765, %v2776
        %v2789 = vadd.f32 %v2766, %v2776
        %v2790 = vadd.f32 %v2767, %v2776
        %v2791 = vadd.f32 %v2768, %v2776
        %v2792 = vadd.f32 %v2769, %v2776
        %v2793 = vadd.f32 %v2770, %v2776
        %v2794 = vmax.f32 %v2778, 0.0
        %v2795 = vmax.f32 %v2779, 0.0
        %v2796 = vmax.f32 %v2780, 0.0
        %v2797 = vmax.f32 %v2781, 0.0
        %v2798 = vmax.f32 %v2782, 0.0
        %v2799 = vmax.f32 %v2783, 0.0
        %v2800 = vmax.f32 %v2784, 0.0
        %v2801 = vmax.f32 %v2785, 0.0
        %v2802 = vmax.f32 %v2786, 0.0
        %v2803 = vmax.f32 %v2787, 0.0
        %v2804 = vmax.f32 %v2788, 0.0
        %v2805 = vmax.f32 %v2789, 0.0
        %v2806 = vmax.f32 %v2790, 0.0
        %v2807 = vmax.f32 %v2791, 0.0
        %v2808 = vmax.f32 %v2792, 0.0
        %v2809 = vmax.f32 %v2793, 0.0
        %v2810 = vmin.f32 %v2794, 6.0
        %v2811 = vmin.f32 %v2795, 6.0
        %v2812 = vmin.f32 %v2796, 6.0
        %v2813 = vmin.f32 %v2797, 6.0
        %v2814 = vmin.f32 %v2798, 6.0
        %v2815 = vmin.f32 %v2799, 6.0
        %v2816 = vmin.f32 %v2800, 6.0
        %v2817 = vmin.f32 %v2801, 6.0
        %v2818 = vmin.f32 %v2802, 6.0
        %v2819 = vmin.f32 %v2803, 6.0
        %v2820 = vmin.f32 %v2804, 6.0
        %v2821 = vmin.f32 %v2805, 6.0
        %v2822 = vmin.f32 %v2806, 6.0
        %v2823 = vmin.f32 %v2807, 6.0
        %v2824 = vmin.f32 %v2808, 6.0
        %v2825 = vmin.f32 %v2809, 6.0
        %v2826 = vpack.c.bf16 %v2811, %v2810
        %v2827 = vpack.c.bf16 %v2813, %v2812
        %v2828 = vpack.c.bf16 %v2815, %v2814
        %v2829 = vpack.c.bf16 %v2817, %v2816
        %v2830 = vpack.c.bf16 %v2819, %v2818
        %v2831 = vpack.c.bf16 %v2821, %v2820
        %v2832 = vpack.c.bf16 %v2823, %v2822
        %v2833 = vpack.c.bf16 %v2825, %v2824
        %v2834 = vld [vmem:[#allocation9] sm:$0xf]
        %v2835 = vld [vmem:[#allocation9 + $0x4] sm:$0xf]
        %v2836 = vld [vmem:[#allocation9 + $0x8] sm:$0xf]
        %v2837 = vld [vmem:[#allocation9 + $0xc] sm:$0xf]
        %v2838 = vld [vmem:[#allocation9 + $0x10] sm:$0xf]
        %v2839 = vld [vmem:[#allocation9 + $0x14] sm:$0xf]
        %v2840 = vld [vmem:[#allocation9 + $0x18] sm:$0xf]
        %v2841 = vld [vmem:[#allocation9 + $0x1c] sm:$0xf]
        %v2842 = vld [vmem:[#allocation9 + $0x20] sm:$0xf]
        %v2843 = vld [vmem:[#allocation9 + $0x24] sm:$0xf]
        %v2844 = vld [vmem:[#allocation9 + $0x28] sm:$0xf]
        %v2845 = vld [vmem:[#allocation9 + $0x2c] sm:$0xf]
        %v2846 = vld [vmem:[#allocation9 + $0x30] sm:$0xf]
        %v2847 = vld [vmem:[#allocation9 + $0x34] sm:$0xf]
        %v2848 = vld [vmem:[#allocation9 + $0x38] sm:$0xf]
        %v2849 = vld [vmem:[#allocation9 + $0x3c] sm:$0xf]
        %v2850 = vld [vmem:[%s6] sm:$0x1]
        %v2852 = vlaneseq
        %v2853 = vshrl.u32 %v2852, 7
        %v2854 = vsub.s32 0, %v2853
        %v2855 = vrot.slane %v2850, %v2854
        %v2873 = vunpack.c.l.b16 %v2834
        %v2874 = vunpack.c.l.b16 %v2835
        %v2875 = vunpack.c.l.b16 %v2836
        %v2876 = vunpack.c.l.b16 %v2837
        %v2877 = vunpack.c.l.b16 %v2838
        %v2878 = vunpack.c.l.b16 %v2839
        %v2879 = vunpack.c.l.b16 %v2840
        %v2880 = vunpack.c.l.b16 %v2841
        %v2881 = vunpack.c.l.b16 %v2842
        %v2882 = vunpack.c.l.b16 %v2843
        %v2883 = vunpack.c.l.b16 %v2844
        %v2884 = vunpack.c.l.b16 %v2845
        %v2885 = vunpack.c.l.b16 %v2846
        %v2886 = vunpack.c.l.b16 %v2847
        %v2887 = vunpack.c.l.b16 %v2848
        %v2888 = vunpack.c.l.b16 %v2849
        %v2889 = vpack.c.b16 %v2874, %v2873
        %v2890 = vpack.c.b16 %v2876, %v2875
        %v2891 = vpack.c.b16 %v2878, %v2877
        %v2892 = vpack.c.b16 %v2880, %v2879
        %v2893 = vpack.c.b16 %v2882, %v2881
        %v2894 = vpack.c.b16 %v2884, %v2883
        %v2895 = vpack.c.b16 %v2886, %v2885
        %v2896 = vpack.c.b16 %v2888, %v2887
        %2905 = vmatprep.subr.bf16.mxu0 0
        %2906 = vmatpush1.bf16.msra.mxu0 %v2896
        %2907 = vmatprep.subr.bf16.mxu0 0
        %2908 = vmatpush1.bf16.msra.mxu0 %v2895
        %2909 = vmatprep.subr.bf16.mxu0 0
        %2910 = vmatpush1.bf16.msra.mxu0 %v2894
        %2911 = vmatprep.subr.bf16.mxu0 0
        %2912 = vmatpush1.bf16.msra.mxu0 %v2893
        %2913 = vmatprep.subr.bf16.mxu0 0
        %2914 = vmatpush1.bf16.msra.mxu0 %v2892
        %2915 = vmatprep.subr.bf16.mxu0 0
        %2916 = vmatpush1.bf16.msra.mxu0 %v2891
        %2917 = vmatprep.subr.bf16.mxu0 0
        %2918 = vmatpush1.bf16.msra.mxu0 %v2890
        %2919 = vmatprep.subr.bf16.mxu0 0
        %2920 = vmatpush1.bf16.msra.mxu0 %v2889
        %2921 = vmatprep.subr.bf16.mxu0 0
        %2922 = vmatpush2.bf16.msra.mxu0 0
        %2923 = vmatprep.subr.bf16.mxu0 0
        %2924 = vmatpush2.bf16.msra.mxu0 0
        %2925 = vmatprep.subr.bf16.mxu0 0
        %2926 = vmatpush2.bf16.msra.mxu0 0
        %2927 = vmatprep.subr.bf16.mxu0 0
        %2928 = vmatpush2.bf16.msra.mxu0 0
        %2929 = vmatprep.subr.bf16.mxu0 0
        %2930 = vmatpush2.bf16.msra.mxu0 0
        %2931 = vmatprep.subr.bf16.mxu0 0
        %2932 = vmatpush2.bf16.msra.mxu0 0
        %2933 = vmatprep.subr.bf16.mxu0 0
        %2934 = vmatpush2.bf16.msra.mxu0 0
        %2935 = vmatprep.subr.bf16.mxu0 0
        %2936 = vmatpush2.bf16.msra.mxu0 0
        %2937 = vmatprep.mubr.bf16.mxu0 0
        %2938 = vmatmul.mubr.bf16.gmra.mxu0 %v2826
        %v2939 = vpop.f32.mrf.mxu0
        %v2940 = vadd.f32 %v2855, %v2939
        %v2941 = vpop.f32.mrf.mxu0
        %v2942 = vpop.f32.mrf.mxu0
        %v2943 = vadd.f32 %v2855, %v2942
        %v2944 = vpop.f32.mrf.mxu0
        %2945 = vmatprep.mubr.bf16.mxu0 0
        %2946 = vmatmul.mubr.bf16.gmra.mxu0 %v2827
        %v2947 = vpop.f32.mrf.mxu0
        %v2948 = vadd.f32 %v2855, %v2947
        %v2949 = vpop.f32.mrf.mxu0
        %v2950 = vpop.f32.mrf.mxu0
        %v2951 = vadd.f32 %v2855, %v2950
        %v2952 = vpop.f32.mrf.mxu0
        %2953 = vmatprep.mubr.bf16.mxu0 0
        %2954 = vmatmul.mubr.bf16.gmra.mxu0 %v2828
        %v2955 = vpop.f32.mrf.mxu0
        %v2956 = vadd.f32 %v2855, %v2955
        %v2957 = vpop.f32.mrf.mxu0
        %v2958 = vpop.f32.mrf.mxu0
        %v2959 = vadd.f32 %v2855, %v2958
        %v2960 = vpop.f32.mrf.mxu0
        %2961 = vmatprep.mubr.bf16.mxu0 0
        %2962 = vmatmul.mubr.bf16.gmra.mxu0 %v2829
        %v2963 = vpop.f32.mrf.mxu0
        %v2964 = vadd.f32 %v2855, %v2963
        %v2965 = vpop.f32.mrf.mxu0
        %v2966 = vpop.f32.mrf.mxu0
        %v2967 = vadd.f32 %v2855, %v2966
        %v2968 = vpop.f32.mrf.mxu0
        %2969 = vmatprep.mubr.bf16.mxu0 0
        %2970 = vmatmul.mubr.bf16.gmra.mxu0 %v2830
        %v2971 = vpop.f32.mrf.mxu0
        %v2972 = vadd.f32 %v2855, %v2971
        %v2973 = vpop.f32.mrf.mxu0
        %v2974 = vpop.f32.mrf.mxu0
        %v2975 = vadd.f32 %v2855, %v2974
        %v2976 = vpop.f32.mrf.mxu0
        %2977 = vmatprep.mubr.bf16.mxu0 0
        %2978 = vmatmul.mubr.bf16.gmra.mxu0 %v2831
        %v2979 = vpop.f32.mrf.mxu0
        %v2980 = vadd.f32 %v2855, %v2979
        %v2981 = vpop.f32.mrf.mxu0
        %v2982 = vpop.f32.mrf.mxu0
        %v2983 = vadd.f32 %v2855, %v2982
        %v2984 = vpop.f32.mrf.mxu0
        %2985 = vmatprep.mubr.bf16.mxu0 0
        %2986 = vmatmul.mubr.bf16.gmra.mxu0 %v2832
        %v2987 = vpop.f32.mrf.mxu0
        %v2988 = vadd.f32 %v2855, %v2987
        %v2989 = vpop.f32.mrf.mxu0
        %v2990 = vpop.f32.mrf.mxu0
        %v2991 = vadd.f32 %v2855, %v2990
        %v2992 = vpop.f32.mrf.mxu0
        %2993 = vmatprep.mubr.bf16.mxu0 0
        %2994 = vmatmul.mubr.bf16.gmra.mxu0 %v2833
        %v2995 = vpop.f32.mrf.mxu0
        %v2996 = vadd.f32 %v2855, %v2995
        %v2997 = vpop.f32.mrf.mxu0
        %v2998 = vpop.f32.mrf.mxu0
        %v2999 = vadd.f32 %v2855, %v2998
        %v3000 = vpop.f32.mrf.mxu0
        %3001 = vdwg.mxu0
        %s3002 = smul.u32 %s31, 8
        %s3003 = smul.u32 %s3002, 16
        %s3004 = scalar_lea.vmem %s312, %s3003 [#allocation3]
        %v3005 = vld [vmem:[%s3004] sm:$0xff]
        %v3006 = vld [vmem:[%s3004 + $0x8] sm:$0xff]
        %v3007 = vld [vmem:[%s3004 + $0x10] sm:$0xff]
        %v3008 = vld [vmem:[%s3004 + $0x18] sm:$0xff]
        %v3009 = vld [vmem:[%s3004 + $0x20] sm:$0xff]
        %v3010 = vld [vmem:[%s3004 + $0x28] sm:$0xff]
        %v3011 = vld [vmem:[%s3004 + $0x30] sm:$0xff]
        %v3012 = vld [vmem:[%s3004 + $0x38] sm:$0xff]
        %v3013 = vld [vmem:[%s3004 + $0x40] sm:$0xff]
        %v3014 = vld [vmem:[%s3004 + $0x48] sm:$0xff]
        %v3015 = vld [vmem:[%s3004 + $0x50] sm:$0xff]
        %v3016 = vld [vmem:[%s3004 + $0x58] sm:$0xff]
        %v3017 = vld [vmem:[%s3004 + $0x60] sm:$0xff]
        %v3018 = vld [vmem:[%s3004 + $0x68] sm:$0xff]
        %v3019 = vld [vmem:[%s3004 + $0x70] sm:$0xff]
        %v3020 = vld [vmem:[%s3004 + $0x78] sm:$0xff]
        %v3021 = vadd.f32 %v2940, %v3005
        %v3022 = vadd.f32 %v2943, %v3006
        %v3023 = vadd.f32 %v2948, %v3007
        %v3024 = vadd.f32 %v2951, %v3008
        %v3025 = vadd.f32 %v2956, %v3009
        %v3026 = vadd.f32 %v2959, %v3010
        %v3027 = vadd.f32 %v2964, %v3011
        %v3028 = vadd.f32 %v2967, %v3012
        %v3029 = vadd.f32 %v2972, %v3013
        %v3030 = vadd.f32 %v2975, %v3014
        %v3031 = vadd.f32 %v2980, %v3015
        %v3032 = vadd.f32 %v2983, %v3016
        %v3033 = vadd.f32 %v2988, %v3017
        %v3034 = vadd.f32 %v2991, %v3018
        %v3035 = vadd.f32 %v2996, %v3019
        %v3036 = vadd.f32 %v2999, %v3020
        %3037 = vst [vmem:[%s354] sm:$0xff] %v3021
        %3038 = vst [vmem:[%s354 + $0x8] sm:$0xff] %v3022
        %3039 = vst [vmem:[%s354 + $0x10] sm:$0xff] %v3023
        %3040 = vst [vmem:[%s354 + $0x18] sm:$0xff] %v3024
        %3041 = vst [vmem:[%s354 + $0x20] sm:$0xff] %v3025
        %3042 = vst [vmem:[%s354 + $0x28] sm:$0xff] %v3026
        %3043 = vst [vmem:[%s354 + $0x30] sm:$0xff] %v3027
        %3044 = vst [vmem:[%s354 + $0x38] sm:$0xff] %v3028
        %3045 = vst [vmem:[%s354 + $0x40] sm:$0xff] %v3029
        %3046 = vst [vmem:[%s354 + $0x48] sm:$0xff] %v3030
        %3047 = vst [vmem:[%s354 + $0x50] sm:$0xff] %v3031
        %3048 = vst [vmem:[%s354 + $0x58] sm:$0xff] %v3032
        %3049 = vst [vmem:[%s354 + $0x60] sm:$0xff] %v3033
        %3050 = vst [vmem:[%s354 + $0x68] sm:$0xff] %v3034
        %3051 = vst [vmem:[%s354 + $0x70] sm:$0xff] %v3035
        %3052 = vst [vmem:[%s354 + $0x78] sm:$0xff] %v3036
        %s3053 = sand.u32 %s200, 1
        %s3054 = scalar_lea.sflag [#allocation5], %s3053
        %s3055 = sand.u32 %s200, 1
        %s3056 = smul.addr %s3055, 128
        %s3057 = scalar_lea.vmem [#allocation11], %s3056
        // Predicated region
        $region73: #{tpu_custom_call.1} parent=47 // pred_check
          %p3058 = pneg %p210
        $region74: #{tpu_custom_call.1} parent=47 // pred_check_branch
          %3060 = sbr.rel (%p3058) target = $region76
        $region75: #{tpu_custom_call.1} parent=47 // pred_region
          %s3061 = smul.u32 8, %s31
          %s3063 = ssub.s32 2048, 2048
          %3064 = vsyncadd %s3054, %s3063
          %s3065 = smul.addr %s3061, 2
          %s3066 = smul.addr %s30, 32
          %s3067 = sadd.s32 %s3065, %s3066
          %s3068 = smul.addr %s3067, 128
          %s3069 = scalar_lea.hbm %s7, %s3068
          %s3070 = sshll.u32 %s3057, 4
          %s3071 = int_to_ptr.vmem [resolvable:$true] %s3070
          %3076 = dma.vmem_to_hbm [thread:$0]  %s3071, 2048, %s3069, %s3054, 128, 128, 8
        $region76: #{tpu_custom_call.1} parent=47 // pred_fallthru
          _
      $region48: #{tpu_custom_call.1} parent=5 // pred_fallthru
        _
      %p3077 = scmp.le.s32.totalorder 2, %s21
      // Predicated region
      $region77: #{tpu_custom_call.1} parent=5 // pred_check
        %p3078 = pneg %p3077
      $region78: #{tpu_custom_call.1} parent=5 // pred_check_branch
        %3080 = sbr.rel (%p3078) target = $region80
      $region79: #{tpu_custom_call.1} parent=5 // pred_region
        %s3081 = ssub.s32 %s21, 2
        // Predicated region
        $region81: #{tpu_custom_call.1} parent=79 // pred_check
          %p3082 = pneg %p216
        $region82: #{tpu_custom_call.1} parent=79 // pred_check_branch
          %3084 = sbr.rel (%p3082) target = $region84
        $region83: #{tpu_custom_call.1} parent=79 // pred_region
          %s3085 = sand.u32 %s201, 1
          %s3086 = scalar_lea.sflag [#allocation5], %s3085
          %s3087 = sand.u32 %s201, 1
          %s3088 = smul.addr %s3087, 128
          %s3089 = scalar_lea.vmem [#allocation11], %s3088
          %3090 = dma.done %s3086, 2048
        $region84: #{tpu_custom_call.1} parent=79 // pred_fallthru
          _
      $region80: #{tpu_custom_call.1} parent=5 // pred_fallthru
        _
    $region6: #{tpu_custom_call.1} parent=1 // loop_footer
      %s25 = sadd.s32 1, %s21
    $region7: #{tpu_custom_call.1} parent=1 // loop_footer_branch
      %20 = sbr.rel target = $region3
    $region8: #{tpu_custom_call.1} parent=1 // loop_exit
      _
    %3091 = vsyncpa [#allocation4], 1
    %s3092 = scalar_lea.sflag [#allocation4], 1
    %3093 = vsyncpa %s3092, 1
    %3094 = vsyncpa [#allocation7], 1
    %3095 = vsyncpa [#allocation10], 1
    %3096 = vsyncpa [#allocation5], 1
    %s3097 = scalar_lea.sflag [#allocation5], 1
    %3098 = vsyncpa %s3097, 1

</llo_original>
